<compile_context>
chip_gen: v5e
topology: v5e:2x2
jax: 0.10.0
libtpu: 0.0.40
codegen_flags: <defaults>
</compile_context>

<pallas_src>
import functools

import jax
import jax.numpy as jnp
from jax.experimental import pallas as pl
from jax.experimental.pallas import tpu as pltpu

# ---------------------------------------------------------------------------
# config (small, deterministic synthetic stand-in for 'vit_base', patch=8)
# ---------------------------------------------------------------------------
PATCH_SIZE = 8
EMBED_DIM = 32
NUM_HEADS = 4
DEPTH = 2
MLP_RATIO = 4
LN_EPS = 1e-6
IMAGENET_MEAN = (0.485, 0.456, 0.406)
IMAGENET_STD = (0.229, 0.224, 0.225)


# ---------------------------------------------------------------------------
# in-kernel helpers
# ---------------------------------------------------------------------------
def _layernorm(x, gamma, beta, eps=LN_EPS):
    mu = jnp.mean(x, axis=-1, keepdims=True)
    var = jnp.mean(jnp.square(x - mu), axis=-1, keepdims=True)
    return (x - mu) * jax.lax.rsqrt(var + eps) * gamma + beta


def _gelu_tanh(x):
    # tanh-form GELU: tanh runs on the EUP (its own VLIW slot) instead of a
    # ~10-op VALU erf polynomial.
    c = 0.7978845608028654  # sqrt(2/pi)
    return 0.5 * x * (1.0 + jnp.tanh(c * (x + 0.044715 * x * x * x)))


def _softmax_lastdim(x):
    m = jnp.max(x, axis=-1, keepdims=True)
    e = jnp.exp(x - m)
    return e * pl.reciprocal(jnp.sum(e, axis=-1, keepdims=True), approx=True)


# ---------------------------------------------------------------------------
# single fused kernel: patch embed + cls/pos + DEPTH transformer blocks,
# emitting the last block's qkv lane-dense as (N, 128) (cols 3C..128 are 0)
# ---------------------------------------------------------------------------
def dino_vit_kernel(patches_ref, pw_ref, poscls_ref,
                    ln1g_ref, ln1b_ref, wqkv_ref, bqkv_ref,
                    wproj_ref, bproj_ref, ln2g_ref, ln2b_ref,
                    w1_ref, b1_ref, w2_ref, b2_ref,
                    qkv_ref, *, depth, num_heads, head_dim):
    C = num_heads * head_dim

    # Patch embed. ImageNet normalize is folded into pw; the patch-embed
    # bias, cls token and positional embedding are all folded into poscls
    # (row 0 of patches is zero, so row 0 becomes cls + pos[0]).  No concat.
    x = jnp.dot(patches_ref[...], pw_ref[...],
                preferred_element_type=jnp.float32) + poscls_ref[...]   # (N, C)

    for d in range(depth):                                    # static unroll
        # ---- pre-norm merged qkv projection (lane-padded to 128) ----
        xn = _layernorm(x, ln1g_ref[d], ln1b_ref[d])
        qkv = jnp.dot(xn, wqkv_ref[d],
                      preferred_element_type=jnp.float32) + bqkv_ref[d]  # (N, P3C)

        if d == depth - 1:
            # Last block: all the module returns is this block's qkv.
            # Lane-dense unmasked store, then stop — the attention /
            # output-proj / MLP of this block are never emitted.
            qkv_ref[...] = qkv
            break

        # ---- attention (blocks 0 .. depth-2 only) ----
        # q columns were pre-scaled by head_dim**-0.5 on the host.
        heads = []
        for h in range(num_heads):                            # static unroll
            lo = h * head_dim
            qh = qkv[:, lo:lo + head_dim]                     # (N, Dh)
            kh = qkv[:, C + lo:C + lo + head_dim]
            vh = qkv[:, 2 * C + lo:2 * C + lo + head_dim]
            logits = jax.lax.dot_general(
                qh, kh, (((1,), (1,)), ((), ())),
                preferred_element_type=jnp.float32)           # (N, N) q @ k^T
            attn = _softmax_lastdim(logits)
            heads.append(jnp.dot(attn, vh,
                                 preferred_element_type=jnp.float32))  # (N, Dh)
        # lane-contiguous head concat -> ONE K=C output-projection matmul
        o = jnp.concatenate(heads, axis=-1)                   # (N, C)
        x = x + jnp.dot(o, wproj_ref[d],
                        preferred_element_type=jnp.float32) + bproj_ref[d]

        # ---- pre-norm MLP ----
        xn2 = _layernorm(x, ln2g_ref[d], ln2b_ref[d])
        h1 = _gelu_tanh(jnp.dot(xn2, w1_ref[d],
                                preferred_element_type=jnp.float32) + b1_ref[d])
        x = x + jnp.dot(h1, w2_ref[d],
                        preferred_element_type=jnp.float32) + b2_ref[d]


def dino_vit_forward(patches, pw, poscls, wqkv, bqkv, params, num_heads):
    """patches: (B, N, F) with a zero row 0 per image; returns (B, N, P3C)."""
    B, N, F = patches.shape
    C = pw.shape[1]
    D = wqkv.shape[0]
    P3C = wqkv.shape[2]
    Ch = params["w1"].shape[2]
    Dh = C // num_heads

    kernel = functools.partial(dino_vit_kernel, depth=D,
                               num_heads=num_heads, head_dim=Dh)

    def full2(r, c):
        return pl.BlockSpec((r, c), lambda b: (0, 0))

    def full3(a, r, c):
        return pl.BlockSpec((a, r, c), lambda b: (0, 0, 0))

    return pl.pallas_call(
        kernel,
        out_shape=jax.ShapeDtypeStruct((B, N, P3C), jnp.float32),
        grid=(B,),
        in_specs=[
            pl.BlockSpec((None, N, F), lambda b: (b, 0, 0)),   # patches (+zero row)
            full2(F, C),                                       # folded patch weight
            full2(N, C),                                       # pos + cls + bias
            full3(D, 1, C), full3(D, 1, C),                    # ln1 gamma/beta
            full3(D, C, P3C), full3(D, 1, P3C),                # wqkv / bqkv (padded)
            full3(D, C, C), full3(D, 1, C),                    # wproj / bproj
            full3(D, 1, C), full3(D, 1, C),                    # ln2 gamma/beta
            full3(D, C, Ch), full3(D, 1, Ch),                  # mlp w1 / b1
            full3(D, Ch, C), full3(D, 1, C),                   # mlp w2 / b2
        ],
        out_specs=pl.BlockSpec((None, N, P3C), lambda b: (b, 0, 0)),
        compiler_params=pltpu.CompilerParams(
            dimension_semantics=("parallel",)),   # shards batch across TCs when B>1
    )(patches, pw, poscls,
      params["ln1_g"], params["ln1_b"], wqkv, bqkv,
      params["wproj"], params["bproj"], params["ln2_g"], params["ln2_b"],
      params["w1"], params["b1"], params["w2"], params["b2"])


# ---------------------------------------------------------------------------
# parameters (deterministic synthetic weights — no checkpoint loading)
# ---------------------------------------------------------------------------
def init_params(key, num_patches, patch_size=PATCH_SIZE, embed_dim=EMBED_DIM,
                depth=DEPTH, mlp_ratio=MLP_RATIO):
    F = 3 * patch_size * patch_size
    Ch = embed_dim * mlp_ratio
    n_tokens = num_patches + 1
    ks = jax.random.split(key, 8)

    def nrm(k, shape, s=0.02):
        return (s * jax.random.normal(k, shape)).astype(jnp.float32)

    return {
        "patch_w": nrm(ks[0], (F, embed_dim)),
        "patch_b": jnp.zeros((1, embed_dim), jnp.float32),
        "cls_token": nrm(ks[1], (1, embed_dim)),
        "pos_embed": nrm(ks[2], (n_tokens, embed_dim)),
        # per-block weights stacked on a leading depth axis so both blocks run
        # inside one pallas_call (static unroll over depth inside the kernel)
        "ln1_g": jnp.ones((depth, 1, embed_dim), jnp.float32),
        "ln1_b": jnp.zeros((depth, 1, embed_dim), jnp.float32),
        "wqkv": nrm(ks[3], (depth, embed_dim, 3 * embed_dim)),
        "bqkv": nrm(ks[4], (depth, 1, 3 * embed_dim)),
        "wproj": nrm(ks[5], (depth, embed_dim, embed_dim)),
        "bproj": jnp.zeros((depth, 1, embed_dim), jnp.float32),
        "ln2_g": jnp.ones((depth, 1, embed_dim), jnp.float32),
        "ln2_b": jnp.zeros((depth, 1, embed_dim), jnp.float32),
        "w1": nrm(ks[6], (depth, embed_dim, Ch)),
        "b1": jnp.zeros((depth, 1, Ch), jnp.float32),
        "w2": nrm(ks[7], (depth, Ch, embed_dim)),
        "b2": jnp.zeros((depth, 1, embed_dim), jnp.float32),
    }


# ---------------------------------------------------------------------------
# forward (mirrors DinoSelfAttention.forward: returns qkv of the last block)
# ---------------------------------------------------------------------------
def dino_self_attention_forward(image, params, patch_size=PATCH_SIZE,
                                num_heads=NUM_HEADS):
    # image: (H, W, 3) float32 in [0, 1]  (what torchvision ToTensor sees)
    img = jnp.transpose(image, (2, 0, 1))                     # CHW
    Hc = img.shape[1] - img.shape[1] % patch_size
    Wc = img.shape[2] - img.shape[2] % patch_size
    img = img[:, :Hc, :Wc][None]                              # (1, 3, Hc, Wc)
    B = img.shape[0]
    hf, wf = Hc // patch_size, Wc // patch_size
    F = 3 * patch_size * patch_size
    C = params["patch_w"].shape[1]
    Np = hf * wf
    N = Np + 1
    D = params["wqkv"].shape[0]
    Dh = C // num_heads

    # unfold into patches, flattened in (3, p, p) order == conv weight flatten
    patches = img.reshape(B, 3, hf, patch_size, wf, patch_size)
    patches = jnp.transpose(patches, (0, 2, 4, 1, 3, 5))
    patches = patches.reshape(B, Np, F)
    # prepend a zero patch row: row 0 of the patch-embed matmul contributes
    # nothing, so the cls token (folded into poscls below) lands there with
    # no in-kernel concat.
    patches = jnp.concatenate(
        [jnp.zeros((B, 1, F), jnp.float32), patches], axis=1)  # (B, N, F)

    # fold the ImageNet normalize into the patch-embed weights (host side):
    #   ((p - mean)/std) @ W + b == p @ (W/std) + (b - (mean/std) @ W)
    pp = patch_size * patch_size
    mean_flat = jnp.repeat(jnp.asarray(IMAGENET_MEAN, jnp.float32), pp)   # (F,)
    std_flat = jnp.repeat(jnp.asarray(IMAGENET_STD, jnp.float32), pp)     # (F,)
    pw = params["patch_w"] / std_flat[:, None]
    pb = params["patch_b"] - (mean_flat / std_flat)[None, :] @ params["patch_w"]

    # fold cls token (row 0) and patch-embed bias (rows 1..N-1) into pos embed
    poscls = params["pos_embed"] + jnp.concatenate(
        [params["cls_token"], jnp.broadcast_to(pb, (Np, C))], axis=0)     # (N, C)

    # zero-pad wqkv/bqkv to a lane-dense multiple of 128 and fold the
    # attention scale into the q columns of every block except the last
    # (whose attention is skipped, and whose emitted qkv must be unscaled).
    P3C = ((3 * C + 127) // 128) * 128
    pad = P3C - 3 * C
    wqkv_p = jnp.pad(params["wqkv"], ((0, 0), (0, 0), (0, pad)))
    bqkv_p = jnp.pad(params["bqkv"], ((0, 0), (0, 0), (0, pad)))
    scale = Dh ** -0.5
    qscale = jnp.ones((D, 1, P3C), jnp.float32)
    qscale = qscale.at[:D - 1, :, :C].set(scale)
    wqkv_p = wqkv_p * qscale
    bqkv_p = bqkv_p * qscale

    qkv_pad = dino_vit_forward(patches, pw, poscls, wqkv_p, bqkv_p,
                               params, num_heads)             # (B, N, P3C)

    qkv_raw = qkv_pad[..., :3 * C]                            # (B, N, 3C)
    # same layout transform as torch: qkv.reshape(B,N,3,H,Dh).permute(2,0,3,1,4)
    return jnp.transpose(qkv_raw.reshape(B, N, 3, num_heads, Dh),
                         (2, 0, 3, 1, 4))


# ---------------------------------------------------------------------------
if __name__ == "__main__":
    key = jax.random.PRNGKey(0)
    k_img, k_par = jax.random.split(key)

    H, W = 35, 34                                             # cropped to 32x32
    image = jax.random.uniform(k_img, (H, W, 3), jnp.float32)  # HWC, [0,1]

    hf = (H - H % PATCH_SIZE) // PATCH_SIZE
    wf = (W - W % PATCH_SIZE) // PATCH_SIZE
    num_patches = hf * wf
    params = init_params(k_par, num_patches)

    qkv = dino_self_attention_forward(image, params)
    qkv = jax.block_until_ready(qkv)

    expected = (3, 1, NUM_HEADS, num_patches + 1, EMBED_DIM // NUM_HEADS)
    assert qkv.shape == expected, (qkv.shape, expected)
    assert qkv.dtype == jnp.float32
    assert bool(jnp.all(jnp.isfinite(qkv)))
    print("KERNEL_OK")
</pallas_src>

<mosaic_0001>
module attributes {stable_mosaic.version = 11 : i64} {
  func.func @dino_vit_kernel(%arg0: i32, %arg1: memref<1x17x192xf32, #tpu.memory_space<vmem>>, %arg2: memref<192x32xf32, #tpu.memory_space<vmem>>, %arg3: memref<17x32xf32, #tpu.memory_space<vmem>>, %arg4: memref<2x1x32xf32, #tpu.memory_space<vmem>>, %arg5: memref<2x1x32xf32, #tpu.memory_space<vmem>>, %arg6: memref<2x32x128xf32, #tpu.memory_space<vmem>>, %arg7: memref<2x1x128xf32, #tpu.memory_space<vmem>>, %arg8: memref<2x32x32xf32, #tpu.memory_space<vmem>>, %arg9: memref<2x1x32xf32, #tpu.memory_space<vmem>>, %arg10: memref<2x1x32xf32, #tpu.memory_space<vmem>>, %arg11: memref<2x1x32xf32, #tpu.memory_space<vmem>>, %arg12: memref<2x32x128xf32, #tpu.memory_space<vmem>>, %arg13: memref<2x1x128xf32, #tpu.memory_space<vmem>>, %arg14: memref<2x128x32xf32, #tpu.memory_space<vmem>>, %arg15: memref<2x1x32xf32, #tpu.memory_space<vmem>>, %arg16: memref<1x17x128xf32, #tpu.memory_space<vmem>>) attributes {dimension_semantics = [#tpu.dimension_semantics<parallel>], iteration_bounds = array<i64: 1>, scalar_prefetch = 0 : i64, scratch_operands = 0 : i64, tpu.core_type = #tpu.core_type<tc>, window_params = [{transform_indices = @transform_0, window_bounds = array<i64: 1, 17, 192>}, {pipeline_mode = #tpu.pipeline_mode<synchronous>, transform_indices = @transform_1, window_bounds = array<i64: 192, 32>}, {pipeline_mode = #tpu.pipeline_mode<synchronous>, transform_indices = @transform_2, window_bounds = array<i64: 17, 32>}, {pipeline_mode = #tpu.pipeline_mode<synchronous>, transform_indices = @transform_3, window_bounds = array<i64: 2, 1, 32>}, {pipeline_mode = #tpu.pipeline_mode<synchronous>, transform_indices = @transform_4, window_bounds = array<i64: 2, 1, 32>}, {pipeline_mode = #tpu.pipeline_mode<synchronous>, transform_indices = @transform_5, window_bounds = array<i64: 2, 32, 128>}, {pipeline_mode = #tpu.pipeline_mode<synchronous>, transform_indices = @transform_6, window_bounds = array<i64: 2, 1, 128>}, {pipeline_mode = #tpu.pipeline_mode<synchronous>, transform_indices = @transform_7, window_bounds = array<i64: 2, 32, 32>}, {pipeline_mode = #tpu.pipeline_mode<synchronous>, transform_indices = @transform_8, window_bounds = array<i64: 2, 1, 32>}, {pipeline_mode = #tpu.pipeline_mode<synchronous>, transform_indices = @transform_9, window_bounds = array<i64: 2, 1, 32>}, {pipeline_mode = #tpu.pipeline_mode<synchronous>, transform_indices = @transform_10, window_bounds = array<i64: 2, 1, 32>}, {pipeline_mode = #tpu.pipeline_mode<synchronous>, transform_indices = @transform_11, window_bounds = array<i64: 2, 32, 128>}, {pipeline_mode = #tpu.pipeline_mode<synchronous>, transform_indices = @transform_12, window_bounds = array<i64: 2, 1, 128>}, {pipeline_mode = #tpu.pipeline_mode<synchronous>, transform_indices = @transform_13, window_bounds = array<i64: 2, 128, 32>}, {pipeline_mode = #tpu.pipeline_mode<synchronous>, transform_indices = @transform_14, window_bounds = array<i64: 2, 1, 32>}, {transform_indices = @transform_15, window_bounds = array<i64: 1, 17, 128>}]} {
    %c0 = arith.constant 0 : index
    %c0_0 = arith.constant 0 : index
    %c0_1 = arith.constant 0 : index
    %0 = vector.load %arg1[%c0, %c0_0, %c0_1] : memref<1x17x192xf32, #tpu.memory_space<vmem>>, vector<1x17x192xf32>
    %1 = vector.shape_cast %0 : vector<1x17x192xf32> to vector<17x192xf32>
    %c0_2 = arith.constant 0 : index
    %c0_3 = arith.constant 0 : index
    %2 = vector.load %arg2[%c0_2, %c0_3] : memref<192x32xf32, #tpu.memory_space<vmem>>, vector<192x32xf32>
    %cst = arith.constant dense<0.000000e+00> : vector<17x32xf32>
    %3 = tpu.matmul %1, %2, %cst {dimension_numbers = #tpu.dot_dimension_numbers<[1], [0], [0], [1], [0, 0, 1, 1], [], []>} : vector<17x192xf32>, vector<192x32xf32>, vector<17x32xf32> -> vector<17x32xf32>
    %c0_4 = arith.constant 0 : index
    %c0_5 = arith.constant 0 : index
    %4 = vector.load %arg3[%c0_4, %c0_5] : memref<17x32xf32, #tpu.memory_space<vmem>>, vector<17x32xf32>
    %5 = arith.addf %3, %4 : vector<17x32xf32>
    %c0_6 = arith.constant 0 : index
    %c0_7 = arith.constant 0 : index
    %c0_8 = arith.constant 0 : index
    %6 = vector.load %arg4[%c0_6, %c0_7, %c0_8] : memref<2x1x32xf32, #tpu.memory_space<vmem>>, vector<1x1x32xf32>
    %7 = vector.shape_cast %6 : vector<1x1x32xf32> to vector<1x32xf32>
    %c0_9 = arith.constant 0 : index
    %c0_10 = arith.constant 0 : index
    %c0_11 = arith.constant 0 : index
    %8 = vector.load %arg5[%c0_9, %c0_10, %c0_11] : memref<2x1x32xf32, #tpu.memory_space<vmem>>, vector<1x1x32xf32>
    %9 = vector.shape_cast %8 : vector<1x1x32xf32> to vector<1x32xf32>
    %cst_12 = arith.constant dense<0.000000e+00> : vector<17xf32>
    %10 = vector.multi_reduction <add>, %5, %cst_12 [1] : vector<17x32xf32> to vector<17xf32>
    %11 = vector.shape_cast %10 : vector<17xf32> to vector<17x1xf32>
    %cst_13 = arith.constant 3.200000e+01 : f32
    %12 = vector.broadcast %cst_13 : f32 to vector<17x1xf32>
    %13 = arith.divf %11, %12 : vector<17x1xf32>
    %14 = vector.broadcast %13 : vector<17x1xf32> to vector<17x32xf32>
    %15 = arith.subf %5, %14 : vector<17x32xf32>
    %16 = arith.mulf %15, %15 : vector<17x32xf32>
    %cst_14 = arith.constant dense<0.000000e+00> : vector<17xf32>
    %17 = vector.multi_reduction <add>, %16, %cst_14 [1] : vector<17x32xf32> to vector<17xf32>
    %18 = vector.shape_cast %17 : vector<17xf32> to vector<17x1xf32>
    %cst_15 = arith.constant 3.200000e+01 : f32
    %19 = vector.broadcast %cst_15 : f32 to vector<17x1xf32>
    %20 = arith.divf %18, %19 : vector<17x1xf32>
    %21 = vector.broadcast %13 : vector<17x1xf32> to vector<17x32xf32>
    %22 = arith.subf %5, %21 : vector<17x32xf32>
    %cst_16 = arith.constant 9.99999997E-7 : f32
    %23 = vector.broadcast %cst_16 : f32 to vector<17x1xf32>
    %24 = arith.addf %20, %23 : vector<17x1xf32>
    %25 = math.rsqrt %24 : vector<17x1xf32>
    %26 = vector.broadcast %25 : vector<17x1xf32> to vector<17x32xf32>
    %27 = arith.mulf %22, %26 : vector<17x32xf32>
    %28 = vector.broadcast %7 : vector<1x32xf32> to vector<17x32xf32>
    %29 = arith.mulf %27, %28 : vector<17x32xf32>
    %30 = vector.broadcast %9 : vector<1x32xf32> to vector<17x32xf32>
    %31 = arith.addf %29, %30 : vector<17x32xf32>
    %c0_17 = arith.constant 0 : index
    %c0_18 = arith.constant 0 : index
    %c0_19 = arith.constant 0 : index
    %32 = vector.load %arg6[%c0_17, %c0_18, %c0_19] : memref<2x32x128xf32, #tpu.memory_space<vmem>>, vector<1x32x128xf32>
    %33 = vector.shape_cast %32 : vector<1x32x128xf32> to vector<32x128xf32>
    %cst_20 = arith.constant dense<0.000000e+00> : vector<17x128xf32>
    %34 = tpu.matmul %31, %33, %cst_20 {dimension_numbers = #tpu.dot_dimension_numbers<[1], [0], [0], [1], [0, 0, 1, 1], [], []>} : vector<17x32xf32>, vector<32x128xf32>, vector<17x128xf32> -> vector<17x128xf32>
    %c0_21 = arith.constant 0 : index
    %c0_22 = arith.constant 0 : index
    %c0_23 = arith.constant 0 : index
    %35 = vector.load %arg7[%c0_21, %c0_22, %c0_23] : memref<2x1x128xf32, #tpu.memory_space<vmem>>, vector<1x1x128xf32>
    %36 = vector.shape_cast %35 : vector<1x1x128xf32> to vector<1x128xf32>
    %37 = vector.broadcast %36 : vector<1x128xf32> to vector<17x128xf32>
    %38 = arith.addf %34, %37 : vector<17x128xf32>
    %39 = vector.extract_strided_slice %38 {offsets = [0, 0], sizes = [17, 8], strides = [1, 1]} : vector<17x128xf32> to vector<17x8xf32>
    %40 = vector.extract_strided_slice %38 {offsets = [0, 32], sizes = [17, 8], strides = [1, 1]} : vector<17x128xf32> to vector<17x8xf32>
    %41 = vector.extract_strided_slice %38 {offsets = [0, 64], sizes = [17, 8], strides = [1, 1]} : vector<17x128xf32> to vector<17x8xf32>
    %cst_24 = arith.constant dense<0.000000e+00> : vector<17x17xf32>
    %42 = tpu.matmul %39, %40, %cst_24 {dimension_numbers = #tpu.dot_dimension_numbers<[1], [1], [0], [0], [0, 0, 1, 0], [], []>} : vector<17x8xf32>, vector<17x8xf32>, vector<17x17xf32> -> vector<17x17xf32>
    %cst_25 = arith.constant dense<0xFF800000> : vector<17xf32>
    %43 = vector.multi_reduction <maximumf>, %42, %cst_25 [1] : vector<17x17xf32> to vector<17xf32>
    %44 = vector.shape_cast %43 : vector<17xf32> to vector<17x1xf32>
    %45 = vector.broadcast %44 : vector<17x1xf32> to vector<17x17xf32>
    %46 = arith.subf %42, %45 : vector<17x17xf32>
    %47 = math.exp %46 : vector<17x17xf32>
    %cst_26 = arith.constant dense<0.000000e+00> : vector<17xf32>
    %48 = vector.multi_reduction <add>, %47, %cst_26 [1] : vector<17x17xf32> to vector<17xf32>
    %49 = vector.shape_cast %48 : vector<17xf32> to vector<17x1xf32>
    %50 = tpu.reciprocal %49 {approx = true} : vector<17x1xf32> -> vector<17x1xf32>
    %51 = vector.broadcast %50 : vector<17x1xf32> to vector<17x17xf32>
    %52 = arith.mulf %47, %51 : vector<17x17xf32>
    %cst_27 = arith.constant dense<0.000000e+00> : vector<17x8xf32>
    %53 = tpu.matmul %52, %41, %cst_27 {dimension_numbers = #tpu.dot_dimension_numbers<[1], [0], [0], [1], [0, 0, 1, 1], [], []>} : vector<17x17xf32>, vector<17x8xf32>, vector<17x8xf32> -> vector<17x8xf32>
    %54 = vector.extract_strided_slice %38 {offsets = [0, 8], sizes = [17, 8], strides = [1, 1]} : vector<17x128xf32> to vector<17x8xf32>
    %55 = vector.extract_strided_slice %38 {offsets = [0, 40], sizes = [17, 8], strides = [1, 1]} : vector<17x128xf32> to vector<17x8xf32>
    %56 = vector.extract_strided_slice %38 {offsets = [0, 72], sizes = [17, 8], strides = [1, 1]} : vector<17x128xf32> to vector<17x8xf32>
    %cst_28 = arith.constant dense<0.000000e+00> : vector<17x17xf32>
    %57 = tpu.matmul %54, %55, %cst_28 {dimension_numbers = #tpu.dot_dimension_numbers<[1], [1], [0], [0], [0, 0, 1, 0], [], []>} : vector<17x8xf32>, vector<17x8xf32>, vector<17x17xf32> -> vector<17x17xf32>
    %cst_29 = arith.constant dense<0xFF800000> : vector<17xf32>
    %58 = vector.multi_reduction <maximumf>, %57, %cst_29 [1] : vector<17x17xf32> to vector<17xf32>
    %59 = vector.shape_cast %58 : vector<17xf32> to vector<17x1xf32>
    %60 = vector.broadcast %59 : vector<17x1xf32> to vector<17x17xf32>
    %61 = arith.subf %57, %60 : vector<17x17xf32>
    %62 = math.exp %61 : vector<17x17xf32>
    %cst_30 = arith.constant dense<0.000000e+00> : vector<17xf32>
    %63 = vector.multi_reduction <add>, %62, %cst_30 [1] : vector<17x17xf32> to vector<17xf32>
    %64 = vector.shape_cast %63 : vector<17xf32> to vector<17x1xf32>
    %65 = tpu.reciprocal %64 {approx = true} : vector<17x1xf32> -> vector<17x1xf32>
    %66 = vector.broadcast %65 : vector<17x1xf32> to vector<17x17xf32>
    %67 = arith.mulf %62, %66 : vector<17x17xf32>
    %cst_31 = arith.constant dense<0.000000e+00> : vector<17x8xf32>
    %68 = tpu.matmul %67, %56, %cst_31 {dimension_numbers = #tpu.dot_dimension_numbers<[1], [0], [0], [1], [0, 0, 1, 1], [], []>} : vector<17x17xf32>, vector<17x8xf32>, vector<17x8xf32> -> vector<17x8xf32>
    %69 = vector.extract_strided_slice %38 {offsets = [0, 16], sizes = [17, 8], strides = [1, 1]} : vector<17x128xf32> to vector<17x8xf32>
    %70 = vector.extract_strided_slice %38 {offsets = [0, 48], sizes = [17, 8], strides = [1, 1]} : vector<17x128xf32> to vector<17x8xf32>
    %71 = vector.extract_strided_slice %38 {offsets = [0, 80], sizes = [17, 8], strides = [1, 1]} : vector<17x128xf32> to vector<17x8xf32>
    %cst_32 = arith.constant dense<0.000000e+00> : vector<17x17xf32>
    %72 = tpu.matmul %69, %70, %cst_32 {dimension_numbers = #tpu.dot_dimension_numbers<[1], [1], [0], [0], [0, 0, 1, 0], [], []>} : vector<17x8xf32>, vector<17x8xf32>, vector<17x17xf32> -> vector<17x17xf32>
    %cst_33 = arith.constant dense<0xFF800000> : vector<17xf32>
    %73 = vector.multi_reduction <maximumf>, %72, %cst_33 [1] : vector<17x17xf32> to vector<17xf32>
    %74 = vector.shape_cast %73 : vector<17xf32> to vector<17x1xf32>
    %75 = vector.broadcast %74 : vector<17x1xf32> to vector<17x17xf32>
    %76 = arith.subf %72, %75 : vector<17x17xf32>
    %77 = math.exp %76 : vector<17x17xf32>
    %cst_34 = arith.constant dense<0.000000e+00> : vector<17xf32>
    %78 = vector.multi_reduction <add>, %77, %cst_34 [1] : vector<17x17xf32> to vector<17xf32>
    %79 = vector.shape_cast %78 : vector<17xf32> to vector<17x1xf32>
    %80 = tpu.reciprocal %79 {approx = true} : vector<17x1xf32> -> vector<17x1xf32>
    %81 = vector.broadcast %80 : vector<17x1xf32> to vector<17x17xf32>
    %82 = arith.mulf %77, %81 : vector<17x17xf32>
    %cst_35 = arith.constant dense<0.000000e+00> : vector<17x8xf32>
    %83 = tpu.matmul %82, %71, %cst_35 {dimension_numbers = #tpu.dot_dimension_numbers<[1], [0], [0], [1], [0, 0, 1, 1], [], []>} : vector<17x17xf32>, vector<17x8xf32>, vector<17x8xf32> -> vector<17x8xf32>
    %84 = vector.extract_strided_slice %38 {offsets = [0, 24], sizes = [17, 8], strides = [1, 1]} : vector<17x128xf32> to vector<17x8xf32>
    %85 = vector.extract_strided_slice %38 {offsets = [0, 56], sizes = [17, 8], strides = [1, 1]} : vector<17x128xf32> to vector<17x8xf32>
    %86 = vector.extract_strided_slice %38 {offsets = [0, 88], sizes = [17, 8], strides = [1, 1]} : vector<17x128xf32> to vector<17x8xf32>
    %cst_36 = arith.constant dense<0.000000e+00> : vector<17x17xf32>
    %87 = tpu.matmul %84, %85, %cst_36 {dimension_numbers = #tpu.dot_dimension_numbers<[1], [1], [0], [0], [0, 0, 1, 0], [], []>} : vector<17x8xf32>, vector<17x8xf32>, vector<17x17xf32> -> vector<17x17xf32>
    %cst_37 = arith.constant dense<0xFF800000> : vector<17xf32>
    %88 = vector.multi_reduction <maximumf>, %87, %cst_37 [1] : vector<17x17xf32> to vector<17xf32>
    %89 = vector.shape_cast %88 : vector<17xf32> to vector<17x1xf32>
    %90 = vector.broadcast %89 : vector<17x1xf32> to vector<17x17xf32>
    %91 = arith.subf %87, %90 : vector<17x17xf32>
    %92 = math.exp %91 : vector<17x17xf32>
    %cst_38 = arith.constant dense<0.000000e+00> : vector<17xf32>
    %93 = vector.multi_reduction <add>, %92, %cst_38 [1] : vector<17x17xf32> to vector<17xf32>
    %94 = vector.shape_cast %93 : vector<17xf32> to vector<17x1xf32>
    %95 = tpu.reciprocal %94 {approx = true} : vector<17x1xf32> -> vector<17x1xf32>
    %96 = vector.broadcast %95 : vector<17x1xf32> to vector<17x17xf32>
    %97 = arith.mulf %92, %96 : vector<17x17xf32>
    %cst_39 = arith.constant dense<0.000000e+00> : vector<17x8xf32>
    %98 = tpu.matmul %97, %86, %cst_39 {dimension_numbers = #tpu.dot_dimension_numbers<[1], [0], [0], [1], [0, 0, 1, 1], [], []>} : vector<17x17xf32>, vector<17x8xf32>, vector<17x8xf32> -> vector<17x8xf32>
    %99 = tpu.concatenate %53, %68, %83, %98 in 1 : vector<17x8xf32>, vector<17x8xf32>, vector<17x8xf32>, vector<17x8xf32> -> vector<17x32xf32>
    %c0_40 = arith.constant 0 : index
    %c0_41 = arith.constant 0 : index
    %c0_42 = arith.constant 0 : index
    %100 = vector.load %arg8[%c0_40, %c0_41, %c0_42] : memref<2x32x32xf32, #tpu.memory_space<vmem>>, vector<1x32x32xf32>
    %101 = vector.shape_cast %100 : vector<1x32x32xf32> to vector<32x32xf32>
    %cst_43 = arith.constant dense<0.000000e+00> : vector<17x32xf32>
    %102 = tpu.matmul %99, %101, %cst_43 {dimension_numbers = #tpu.dot_dimension_numbers<[1], [0], [0], [1], [0, 0, 1, 1], [], []>} : vector<17x32xf32>, vector<32x32xf32>, vector<17x32xf32> -> vector<17x32xf32>
    %103 = arith.addf %5, %102 : vector<17x32xf32>
    %c0_44 = arith.constant 0 : index
    %c0_45 = arith.constant 0 : index
    %c0_46 = arith.constant 0 : index
    %104 = vector.load %arg9[%c0_44, %c0_45, %c0_46] : memref<2x1x32xf32, #tpu.memory_space<vmem>>, vector<1x1x32xf32>
    %105 = vector.shape_cast %104 : vector<1x1x32xf32> to vector<1x32xf32>
    %106 = vector.broadcast %105 : vector<1x32xf32> to vector<17x32xf32>
    %107 = arith.addf %103, %106 : vector<17x32xf32>
    %c0_47 = arith.constant 0 : index
    %c0_48 = arith.constant 0 : index
    %c0_49 = arith.constant 0 : index
    %108 = vector.load %arg10[%c0_47, %c0_48, %c0_49] : memref<2x1x32xf32, #tpu.memory_space<vmem>>, vector<1x1x32xf32>
    %109 = vector.shape_cast %108 : vector<1x1x32xf32> to vector<1x32xf32>
    %c0_50 = arith.constant 0 : index
    %c0_51 = arith.constant 0 : index
    %c0_52 = arith.constant 0 : index
    %110 = vector.load %arg11[%c0_50, %c0_51, %c0_52] : memref<2x1x32xf32, #tpu.memory_space<vmem>>, vector<1x1x32xf32>
    %111 = vector.shape_cast %110 : vector<1x1x32xf32> to vector<1x32xf32>
    %cst_53 = arith.constant dense<0.000000e+00> : vector<17xf32>
    %112 = vector.multi_reduction <add>, %107, %cst_53 [1] : vector<17x32xf32> to vector<17xf32>
    %113 = vector.shape_cast %112 : vector<17xf32> to vector<17x1xf32>
    %cst_54 = arith.constant 3.200000e+01 : f32
    %114 = vector.broadcast %cst_54 : f32 to vector<17x1xf32>
    %115 = arith.divf %113, %114 : vector<17x1xf32>
    %116 = vector.broadcast %115 : vector<17x1xf32> to vector<17x32xf32>
    %117 = arith.subf %107, %116 : vector<17x32xf32>
    %118 = arith.mulf %117, %117 : vector<17x32xf32>
    %cst_55 = arith.constant dense<0.000000e+00> : vector<17xf32>
    %119 = vector.multi_reduction <add>, %118, %cst_55 [1] : vector<17x32xf32> to vector<17xf32>
    %120 = vector.shape_cast %119 : vector<17xf32> to vector<17x1xf32>
    %cst_56 = arith.constant 3.200000e+01 : f32
    %121 = vector.broadcast %cst_56 : f32 to vector<17x1xf32>
    %122 = arith.divf %120, %121 : vector<17x1xf32>
    %123 = vector.broadcast %115 : vector<17x1xf32> to vector<17x32xf32>
    %124 = arith.subf %107, %123 : vector<17x32xf32>
    %cst_57 = arith.constant 9.99999997E-7 : f32
    %125 = vector.broadcast %cst_57 : f32 to vector<17x1xf32>
    %126 = arith.addf %122, %125 : vector<17x1xf32>
    %127 = math.rsqrt %126 : vector<17x1xf32>
    %128 = vector.broadcast %127 : vector<17x1xf32> to vector<17x32xf32>
    %129 = arith.mulf %124, %128 : vector<17x32xf32>
    %130 = vector.broadcast %109 : vector<1x32xf32> to vector<17x32xf32>
    %131 = arith.mulf %129, %130 : vector<17x32xf32>
    %132 = vector.broadcast %111 : vector<1x32xf32> to vector<17x32xf32>
    %133 = arith.addf %131, %132 : vector<17x32xf32>
    %c0_58 = arith.constant 0 : index
    %c0_59 = arith.constant 0 : index
    %c0_60 = arith.constant 0 : index
    %134 = vector.load %arg12[%c0_58, %c0_59, %c0_60] : memref<2x32x128xf32, #tpu.memory_space<vmem>>, vector<1x32x128xf32>
    %135 = vector.shape_cast %134 : vector<1x32x128xf32> to vector<32x128xf32>
    %cst_61 = arith.constant dense<0.000000e+00> : vector<17x128xf32>
    %136 = tpu.matmul %133, %135, %cst_61 {dimension_numbers = #tpu.dot_dimension_numbers<[1], [0], [0], [1], [0, 0, 1, 1], [], []>} : vector<17x32xf32>, vector<32x128xf32>, vector<17x128xf32> -> vector<17x128xf32>
    %c0_62 = arith.constant 0 : index
    %c0_63 = arith.constant 0 : index
    %c0_64 = arith.constant 0 : index
    %137 = vector.load %arg13[%c0_62, %c0_63, %c0_64] : memref<2x1x128xf32, #tpu.memory_space<vmem>>, vector<1x1x128xf32>
    %138 = vector.shape_cast %137 : vector<1x1x128xf32> to vector<1x128xf32>
    %139 = vector.broadcast %138 : vector<1x128xf32> to vector<17x128xf32>
    %140 = arith.addf %136, %139 : vector<17x128xf32>
    %cst_65 = arith.constant 5.000000e-01 : f32
    %141 = vector.broadcast %cst_65 : f32 to vector<17x128xf32>
    %142 = arith.mulf %141, %140 : vector<17x128xf32>
    %cst_66 = arith.constant 4.471500e-02 : f32
    %143 = vector.broadcast %cst_66 : f32 to vector<17x128xf32>
    %144 = arith.mulf %143, %140 : vector<17x128xf32>
    %145 = arith.mulf %144, %140 : vector<17x128xf32>
    %146 = arith.mulf %145, %140 : vector<17x128xf32>
    %147 = arith.addf %140, %146 : vector<17x128xf32>
    %cst_67 = arith.constant 0.797884583 : f32
    %148 = vector.broadcast %cst_67 : f32 to vector<17x128xf32>
    %149 = arith.mulf %148, %147 : vector<17x128xf32>
    %150 = math.tanh %149 : vector<17x128xf32>
    %cst_68 = arith.constant 1.000000e+00 : f32
    %151 = vector.broadcast %cst_68 : f32 to vector<17x128xf32>
    %152 = arith.addf %151, %150 : vector<17x128xf32>
    %153 = arith.mulf %142, %152 : vector<17x128xf32>
    %c0_69 = arith.constant 0 : index
    %c0_70 = arith.constant 0 : index
    %c0_71 = arith.constant 0 : index
    %154 = vector.load %arg14[%c0_69, %c0_70, %c0_71] : memref<2x128x32xf32, #tpu.memory_space<vmem>>, vector<1x128x32xf32>
    %155 = vector.shape_cast %154 : vector<1x128x32xf32> to vector<128x32xf32>
    %cst_72 = arith.constant dense<0.000000e+00> : vector<17x32xf32>
    %156 = tpu.matmul %153, %155, %cst_72 {dimension_numbers = #tpu.dot_dimension_numbers<[1], [0], [0], [1], [0, 0, 1, 1], [], []>} : vector<17x128xf32>, vector<128x32xf32>, vector<17x32xf32> -> vector<17x32xf32>
    %157 = arith.addf %107, %156 : vector<17x32xf32>
    %c0_73 = arith.constant 0 : index
    %c0_74 = arith.constant 0 : index
    %c0_75 = arith.constant 0 : index
    %158 = vector.load %arg15[%c0_73, %c0_74, %c0_75] : memref<2x1x32xf32, #tpu.memory_space<vmem>>, vector<1x1x32xf32>
    %159 = vector.shape_cast %158 : vector<1x1x32xf32> to vector<1x32xf32>
    %160 = vector.broadcast %159 : vector<1x32xf32> to vector<17x32xf32>
    %161 = arith.addf %157, %160 : vector<17x32xf32>
    %c1 = arith.constant 1 : index
    %c0_76 = arith.constant 0 : index
    %c0_77 = arith.constant 0 : index
    %162 = vector.load %arg4[%c1, %c0_76, %c0_77] : memref<2x1x32xf32, #tpu.memory_space<vmem>>, vector<1x1x32xf32>
    %163 = vector.shape_cast %162 : vector<1x1x32xf32> to vector<1x32xf32>
    %c1_78 = arith.constant 1 : index
    %c0_79 = arith.constant 0 : index
    %c0_80 = arith.constant 0 : index
    %164 = vector.load %arg5[%c1_78, %c0_79, %c0_80] : memref<2x1x32xf32, #tpu.memory_space<vmem>>, vector<1x1x32xf32>
    %165 = vector.shape_cast %164 : vector<1x1x32xf32> to vector<1x32xf32>
    %cst_81 = arith.constant dense<0.000000e+00> : vector<17xf32>
    %166 = vector.multi_reduction <add>, %161, %cst_81 [1] : vector<17x32xf32> to vector<17xf32>
    %167 = vector.shape_cast %166 : vector<17xf32> to vector<17x1xf32>
    %cst_82 = arith.constant 3.200000e+01 : f32
    %168 = vector.broadcast %cst_82 : f32 to vector<17x1xf32>
    %169 = arith.divf %167, %168 : vector<17x1xf32>
    %170 = vector.broadcast %169 : vector<17x1xf32> to vector<17x32xf32>
    %171 = arith.subf %161, %170 : vector<17x32xf32>
    %172 = arith.mulf %171, %171 : vector<17x32xf32>
    %cst_83 = arith.constant dense<0.000000e+00> : vector<17xf32>
    %173 = vector.multi_reduction <add>, %172, %cst_83 [1] : vector<17x32xf32> to vector<17xf32>
    %174 = vector.shape_cast %173 : vector<17xf32> to vector<17x1xf32>
    %cst_84 = arith.constant 3.200000e+01 : f32
    %175 = vector.broadcast %cst_84 : f32 to vector<17x1xf32>
    %176 = arith.divf %174, %175 : vector<17x1xf32>
    %177 = vector.broadcast %169 : vector<17x1xf32> to vector<17x32xf32>
    %178 = arith.subf %161, %177 : vector<17x32xf32>
    %cst_85 = arith.constant 9.99999997E-7 : f32
    %179 = vector.broadcast %cst_85 : f32 to vector<17x1xf32>
    %180 = arith.addf %176, %179 : vector<17x1xf32>
    %181 = math.rsqrt %180 : vector<17x1xf32>
    %182 = vector.broadcast %181 : vector<17x1xf32> to vector<17x32xf32>
    %183 = arith.mulf %178, %182 : vector<17x32xf32>
    %184 = vector.broadcast %163 : vector<1x32xf32> to vector<17x32xf32>
    %185 = arith.mulf %183, %184 : vector<17x32xf32>
    %186 = vector.broadcast %165 : vector<1x32xf32> to vector<17x32xf32>
    %187 = arith.addf %185, %186 : vector<17x32xf32>
    %c1_86 = arith.constant 1 : index
    %c0_87 = arith.constant 0 : index
    %c0_88 = arith.constant 0 : index
    %188 = vector.load %arg6[%c1_86, %c0_87, %c0_88] : memref<2x32x128xf32, #tpu.memory_space<vmem>>, vector<1x32x128xf32>
    %189 = vector.shape_cast %188 : vector<1x32x128xf32> to vector<32x128xf32>
    %cst_89 = arith.constant dense<0.000000e+00> : vector<17x128xf32>
    %190 = tpu.matmul %187, %189, %cst_89 {dimension_numbers = #tpu.dot_dimension_numbers<[1], [0], [0], [1], [0, 0, 1, 1], [], []>} : vector<17x32xf32>, vector<32x128xf32>, vector<17x128xf32> -> vector<17x128xf32>
    %c1_90 = arith.constant 1 : index
    %c0_91 = arith.constant 0 : index
    %c0_92 = arith.constant 0 : index
    %191 = vector.load %arg7[%c1_90, %c0_91, %c0_92] : memref<2x1x128xf32, #tpu.memory_space<vmem>>, vector<1x1x128xf32>
    %192 = vector.shape_cast %191 : vector<1x1x128xf32> to vector<1x128xf32>
    %193 = vector.broadcast %192 : vector<1x128xf32> to vector<17x128xf32>
    %194 = arith.addf %190, %193 : vector<17x128xf32>
    %c0_93 = arith.constant 0 : index
    %c0_94 = arith.constant 0 : index
    %c0_95 = arith.constant 0 : index
    %195 = vector.load %arg16[%c0_93, %c0_94, %c0_95] : memref<1x17x128xf32, #tpu.memory_space<vmem>>, vector<1x17x128xf32>
    %196 = vector.shape_cast %195 : vector<1x17x128xf32> to vector<17x128xf32>
    %197 = vector.shape_cast %194 : vector<17x128xf32> to vector<1x17x128xf32>
    tpu.vector_store %arg16[%c0_93, %c0_94, %c0_95], %197 {strides = array<i32>} : memref<1x17x128xf32, #tpu.memory_space<vmem>>, vector<1x17x128xf32>,
    return
  }
  func.func @transform_0(%arg0: i32) -> (i32, i32, i32) {
    %c0_i32 = arith.constant 0 : i32
    %c0_i32_0 = arith.constant 0 : i32
    %c0_i32_1 = arith.constant 0 : i32
    return %arg0, %c0_i32, %c0_i32_0 : i32, i32, i32
  }
  func.func @transform_1(%arg0: i32) -> (i32, i32) {
    %c0_i32 = arith.constant 0 : i32
    %c0_i32_0 = arith.constant 0 : i32
    %c0_i32_1 = arith.constant 0 : i32
    return %c0_i32, %c0_i32_0 : i32, i32
  }
  func.func @transform_2(%arg0: i32) -> (i32, i32) {
    %c0_i32 = arith.constant 0 : i32
    %c0_i32_0 = arith.constant 0 : i32
    %c0_i32_1 = arith.constant 0 : i32
    return %c0_i32, %c0_i32_0 : i32, i32
  }
  func.func @transform_3(%arg0: i32) -> (i32, i32, i32) {
    %c0_i32 = arith.constant 0 : i32
    %c0_i32_0 = arith.constant 0 : i32
    %c0_i32_1 = arith.constant 0 : i32
    %c0_i32_2 = arith.constant 0 : i32
    return %c0_i32, %c0_i32_0, %c0_i32_1 : i32, i32, i32
  }
  func.func @transform_4(%arg0: i32) -> (i32, i32, i32) {
    %c0_i32 = arith.constant 0 : i32
    %c0_i32_0 = arith.constant 0 : i32
    %c0_i32_1 = arith.constant 0 : i32
    %c0_i32_2 = arith.constant 0 : i32
    return %c0_i32, %c0_i32_0, %c0_i32_1 : i32, i32, i32
  }
  func.func @transform_5(%arg0: i32) -> (i32, i32, i32) {
    %c0_i32 = arith.constant 0 : i32
    %c0_i32_0 = arith.constant 0 : i32
    %c0_i32_1 = arith.constant 0 : i32
    %c0_i32_2 = arith.constant 0 : i32
    return %c0_i32, %c0_i32_0, %c0_i32_1 : i32, i32, i32
  }
  func.func @transform_6(%arg0: i32) -> (i32, i32, i32) {
    %c0_i32 = arith.constant 0 : i32
    %c0_i32_0 = arith.constant 0 : i32
    %c0_i32_1 = arith.constant 0 : i32
    %c0_i32_2 = arith.constant 0 : i32
    return %c0_i32, %c0_i32_0, %c0_i32_1 : i32, i32, i32
  }
  func.func @transform_7(%arg0: i32) -> (i32, i32, i32) {
    %c0_i32 = arith.constant 0 : i32
    %c0_i32_0 = arith.constant 0 : i32
    %c0_i32_1 = arith.constant 0 : i32
    %c0_i32_2 = arith.constant 0 : i32
    return %c0_i32, %c0_i32_0, %c0_i32_1 : i32, i32, i32
  }
  func.func @transform_8(%arg0: i32) -> (i32, i32, i32) {
    %c0_i32 = arith.constant 0 : i32
    %c0_i32_0 = arith.constant 0 : i32
    %c0_i32_1 = arith.constant 0 : i32
    %c0_i32_2 = arith.constant 0 : i32
    return %c0_i32, %c0_i32_0, %c0_i32_1 : i32, i32, i32
  }
  func.func @transform_9(%arg0: i32) -> (i32, i32, i32) {
    %c0_i32 = arith.constant 0 : i32
    %c0_i32_0 = arith.constant 0 : i32
    %c0_i32_1 = arith.constant 0 : i32
    %c0_i32_2 = arith.constant 0 : i32
    return %c0_i32, %c0_i32_0, %c0_i32_1 : i32, i32, i32
  }
  func.func @transform_10(%arg0: i32) -> (i32, i32, i32) {
    %c0_i32 = arith.constant 0 : i32
    %c0_i32_0 = arith.constant 0 : i32
    %c0_i32_1 = arith.constant 0 : i32
    %c0_i32_2 = arith.constant 0 : i32
    return %c0_i32, %c0_i32_0, %c0_i32_1 : i32, i32, i32
  }
  func.func @transform_11(%arg0: i32) -> (i32, i32, i32) {
    %c0_i32 = arith.constant 0 : i32
    %c0_i32_0 = arith.constant 0 : i32
    %c0_i32_1 = arith.constant 0 : i32
    %c0_i32_2 = arith.constant 0 : i32
    return %c0_i32, %c0_i32_0, %c0_i32_1 : i32, i32, i32
  }
  func.func @transform_12(%arg0: i32) -> (i32, i32, i32) {
    %c0_i32 = arith.constant 0 : i32
    %c0_i32_0 = arith.constant 0 : i32
    %c0_i32_1 = arith.constant 0 : i32
    %c0_i32_2 = arith.constant 0 : i32
    return %c0_i32, %c0_i32_0, %c0_i32_1 : i32, i32, i32
  }
  func.func @transform_13(%arg0: i32) -> (i32, i32, i32) {
    %c0_i32 = arith.constant 0 : i32
    %c0_i32_0 = arith.constant 0 : i32
    %c0_i32_1 = arith.constant 0 : i32
    %c0_i32_2 = arith.constant 0 : i32
    return %c0_i32, %c0_i32_0, %c0_i32_1 : i32, i32, i32
  }
  func.func @transform_14(%arg0: i32) -> (i32, i32, i32) {
    %c0_i32 = arith.constant 0 : i32
    %c0_i32_0 = arith.constant 0 : i32
    %c0_i32_1 = arith.constant 0 : i32
    %c0_i32_2 = arith.constant 0 : i32
    return %c0_i32, %c0_i32_0, %c0_i32_1 : i32, i32, i32
  }
  func.func @transform_15(%arg0: i32) -> (i32, i32, i32) {
    %c0_i32 = arith.constant 0 : i32
    %c0_i32_0 = arith.constant 0 : i32
    %c0_i32_1 = arith.constant 0 : i32
    return %arg0, %c0_i32, %c0_i32_0 : i32, i32, i32
  }
}

</mosaic_0001>

<llo_original>
// kernel: tpu_custom_call.1
$region0: #{tpu_custom_call.1}
  #allocation0 [shape = 'u32[]', space=smem, size = 0x4, offset = 0x4, fixed_abs, tag = 'smem constant byte address 0x4 - core index']
  #allocation1 [shape = 'u32[72,128]{1,0:T(1,128)}', space=vmem, size = 0x9000, scoped, tag = 'internal scratch']
  %s0 = inlined_call_operand.vmem [shape: f32[1,17,192], index: 0, kind: input, shape index: {}]
  %s1 = inlined_call_operand.vmem [shape: f32[192,32], index: 1, kind: input, shape index: {}]
  %s2 = inlined_call_operand.vmem [shape: f32[17,32], index: 2, kind: input, shape index: {}]
  %s3 = inlined_call_operand.vmem [shape: f32[2,1,32], index: 3, kind: input, shape index: {}]
  %s4 = inlined_call_operand.vmem [shape: f32[2,1,32], index: 4, kind: input, shape index: {}]
  %s5 = inlined_call_operand.vmem [shape: f32[2,32,128], index: 5, kind: input, shape index: {}]
  %s6 = inlined_call_operand.vmem [shape: f32[2,1,128], index: 6, kind: input, shape index: {}]
  %s7 = inlined_call_operand.vmem [shape: f32[2,32,32], index: 7, kind: input, shape index: {}]
  %s8 = inlined_call_operand.vmem [shape: f32[2,1,32], index: 8, kind: input, shape index: {}]
  %s9 = inlined_call_operand.vmem [shape: f32[2,1,32], index: 9, kind: input, shape index: {}]
  %s10 = inlined_call_operand.vmem [shape: f32[2,1,32], index: 10, kind: input, shape index: {}]
  %s11 = inlined_call_operand.vmem [shape: f32[2,32,128], index: 11, kind: input, shape index: {}]
  %s12 = inlined_call_operand.vmem [shape: f32[2,1,128], index: 12, kind: input, shape index: {}]
  %s13 = inlined_call_operand.vmem [shape: f32[2,128,32], index: 13, kind: input, shape index: {}]
  %s14 = inlined_call_operand.vmem [shape: f32[2,1,32], index: 14, kind: input, shape index: {}]
  %s15 = inlined_call_operand.vmem [shape: f32[1,17,128], index: 15, kind: output, shape index: {}]
  %s16 = sld [smem:[#allocation0]]
  $region70: #{tpu_custom_call.1} parent=0
    _
  %s18 = ssub.s32 1, %s16
  %s19 = scalar_select 0, %s18, %s16
  // Predicated region
  $region2: #{tpu_custom_call.1} parent=0 // pred_check
    _
  $region3: #{tpu_custom_call.1} parent=0 // pred_check_branch
    %21 = sbr.rel (0) target = $region5
  $region4: #{tpu_custom_call.1} parent=0 // pred_region
    _
  $region5: #{tpu_custom_call.1} parent=0 // pred_fallthru
    _
  // Predicated region
  $region6: #{tpu_custom_call.1} parent=0 // pred_check
    _
  $region7: #{tpu_custom_call.1} parent=0 // pred_check_branch
    %23 = sbr.rel (0) target = $region9
  $region8: #{tpu_custom_call.1} parent=0 // pred_region
    _
  $region9: #{tpu_custom_call.1} parent=0 // pred_fallthru
    _
  // Predicated region
  $region10: #{tpu_custom_call.1} parent=0 // pred_check
    _
  $region11: #{tpu_custom_call.1} parent=0 // pred_check_branch
    %25 = sbr.rel (0) target = $region13
  $region12: #{tpu_custom_call.1} parent=0 // pred_region
    _
  $region13: #{tpu_custom_call.1} parent=0 // pred_fallthru
    _
  // Predicated region
  $region14: #{tpu_custom_call.1} parent=0 // pred_check
    _
  $region15: #{tpu_custom_call.1} parent=0 // pred_check_branch
    %27 = sbr.rel (0) target = $region17
  $region16: #{tpu_custom_call.1} parent=0 // pred_region
    _
  $region17: #{tpu_custom_call.1} parent=0 // pred_fallthru
    _
  // Predicated region
  $region18: #{tpu_custom_call.1} parent=0 // pred_check
    _
  $region19: #{tpu_custom_call.1} parent=0 // pred_check_branch
    %29 = sbr.rel (0) target = $region21
  $region20: #{tpu_custom_call.1} parent=0 // pred_region
    _
  $region21: #{tpu_custom_call.1} parent=0 // pred_fallthru
    _
  // Predicated region
  $region22: #{tpu_custom_call.1} parent=0 // pred_check
    _
  $region23: #{tpu_custom_call.1} parent=0 // pred_check_branch
    %31 = sbr.rel (0) target = $region25
  $region24: #{tpu_custom_call.1} parent=0 // pred_region
    _
  $region25: #{tpu_custom_call.1} parent=0 // pred_fallthru
    _
  // Predicated region
  $region26: #{tpu_custom_call.1} parent=0 // pred_check
    _
  $region27: #{tpu_custom_call.1} parent=0 // pred_check_branch
    %33 = sbr.rel (0) target = $region29
  $region28: #{tpu_custom_call.1} parent=0 // pred_region
    _
  $region29: #{tpu_custom_call.1} parent=0 // pred_fallthru
    _
  // Predicated region
  $region30: #{tpu_custom_call.1} parent=0 // pred_check
    _
  $region31: #{tpu_custom_call.1} parent=0 // pred_check_branch
    %35 = sbr.rel (0) target = $region33
  $region32: #{tpu_custom_call.1} parent=0 // pred_region
    _
  $region33: #{tpu_custom_call.1} parent=0 // pred_fallthru
    _
  // Predicated region
  $region34: #{tpu_custom_call.1} parent=0 // pred_check
    _
  $region35: #{tpu_custom_call.1} parent=0 // pred_check_branch
    %37 = sbr.rel (0) target = $region37
  $region36: #{tpu_custom_call.1} parent=0 // pred_region
    _
  $region37: #{tpu_custom_call.1} parent=0 // pred_fallthru
    _
  // Predicated region
  $region38: #{tpu_custom_call.1} parent=0 // pred_check
    _
  $region39: #{tpu_custom_call.1} parent=0 // pred_check_branch
    %39 = sbr.rel (0) target = $region41
  $region40: #{tpu_custom_call.1} parent=0 // pred_region
    _
  $region41: #{tpu_custom_call.1} parent=0 // pred_fallthru
    _
  // Predicated region
  $region42: #{tpu_custom_call.1} parent=0 // pred_check
    _
  $region43: #{tpu_custom_call.1} parent=0 // pred_check_branch
    %41 = sbr.rel (0) target = $region45
  $region44: #{tpu_custom_call.1} parent=0 // pred_region
    _
  $region45: #{tpu_custom_call.1} parent=0 // pred_fallthru
    _
  // Predicated region
  $region46: #{tpu_custom_call.1} parent=0 // pred_check
    _
  $region47: #{tpu_custom_call.1} parent=0 // pred_check_branch
    %43 = sbr.rel (0) target = $region49
  $region48: #{tpu_custom_call.1} parent=0 // pred_region
    _
  $region49: #{tpu_custom_call.1} parent=0 // pred_fallthru
    _
  // Predicated region
  $region50: #{tpu_custom_call.1} parent=0 // pred_check
    _
  $region51: #{tpu_custom_call.1} parent=0 // pred_check_branch
    %45 = sbr.rel (0) target = $region53
  $region52: #{tpu_custom_call.1} parent=0 // pred_region
    _
  $region53: #{tpu_custom_call.1} parent=0 // pred_fallthru
    _
  // Predicated region
  $region54: #{tpu_custom_call.1} parent=0 // pred_check
    _
  $region55: #{tpu_custom_call.1} parent=0 // pred_check_branch
    %47 = sbr.rel (0) target = $region57
  $region56: #{tpu_custom_call.1} parent=0 // pred_region
    _
  $region57: #{tpu_custom_call.1} parent=0 // pred_fallthru
    _
  // Predicated region
  $region58: #{tpu_custom_call.1} parent=0 // pred_check
    _
  $region59: #{tpu_custom_call.1} parent=0 // pred_check_branch
    %49 = sbr.rel (0) target = $region61
  $region60: #{tpu_custom_call.1} parent=0 // pred_region
    _
  $region61: #{tpu_custom_call.1} parent=0 // pred_fallthru
    _
  %v50 = vld [vmem:[%s0] sm:$0xff]
  %v51 = vld [vmem:[%s0 + $0x8] sm:$0xff]
  %v52 = vld [vmem:[%s0 + $0x10] sm:$0xff]
  %v53 = vld [vmem:[%s0 + $0x18] sm:$0xff]
  %v54 = vld [vmem:[%s0 + $0x20] sm:$0x1]
  %v55 = vld [vmem:[%s0 + $0x28] sm:$0x1]
  %v56 = vld [vmem:[%s1] sm:$0xff]
  %v57 = vld [vmem:[%s1 + $0x8] sm:$0xff]
  %v58 = vld [vmem:[%s1 + $0x10] sm:$0xff]
  %v59 = vld [vmem:[%s1 + $0x18] sm:$0xff]
  %v60 = vld [vmem:[%s1 + $0x20] sm:$0xff]
  %v61 = vld [vmem:[%s1 + $0x28] sm:$0xff]
  %v62 = vld [vmem:[%s1 + $0x30] sm:$0xff]
  %v63 = vld [vmem:[%s1 + $0x38] sm:$0xff]
  %v64 = vld [vmem:[%s1 + $0x40] sm:$0xff]
  %v65 = vld [vmem:[%s1 + $0x48] sm:$0xff]
  %v66 = vld [vmem:[%s1 + $0x50] sm:$0xff]
  %v67 = vld [vmem:[%s1 + $0x58] sm:$0xff]
  %v68 = vld [vmem:[%s1 + $0x60] sm:$0xff]
  %v69 = vld [vmem:[%s1 + $0x68] sm:$0xff]
  %v70 = vld [vmem:[%s1 + $0x70] sm:$0xff]
  %v71 = vld [vmem:[%s1 + $0x78] sm:$0xff]
  %v72 = vld [vmem:[%s1 + $0x80] sm:$0xff]
  %v73 = vld [vmem:[%s1 + $0x88] sm:$0xff]
  %v74 = vld [vmem:[%s1 + $0x90] sm:$0xff]
  %v75 = vld [vmem:[%s1 + $0x98] sm:$0xff]
  %v76 = vld [vmem:[%s1 + $0xa0] sm:$0xff]
  %v77 = vld [vmem:[%s1 + $0xa8] sm:$0xff]
  %v78 = vld [vmem:[%s1 + $0xb0] sm:$0xff]
  %v79 = vld [vmem:[%s1 + $0xb8] sm:$0xff]
  %v80 = vld [vmem:[%s2] sm:$0xff]
  %v81 = vld [vmem:[%s2 + $0x8] sm:$0xff]
  %v82 = vld [vmem:[%s2 + $0x10] sm:$0x1]
  %vm83 = vcmask 523264
  %v85 = vsel %vm83, %v51, 0
  %v88 = vsel %vm83, %v53, 0
  %v91 = vsel %vm83, %v55, 0
  %93 = vmatpush.msra.mxu0 %v71
  %94 = vmatpush.msra.mxu0 %v70
  %95 = vmatpush.msra.mxu0 %v69
  %96 = vmatpush.msra.mxu0 %v68
  %97 = vmatpush.msra.mxu0 %v67
  %98 = vmatpush.msra.mxu0 %v66
  %99 = vmatpush.msra.mxu0 %v65
  %100 = vmatpush.msra.mxu0 %v64
  %101 = vmatpush.msra.mxu0 %v63
  %102 = vmatpush.msra.mxu0 %v62
  %103 = vmatpush.msra.mxu0 %v61
  %104 = vmatpush.msra.mxu0 %v60
  %105 = vmatpush.msra.mxu0 %v59
  %106 = vmatpush.msra.mxu0 %v58
  %107 = vmatpush.msra.mxu0 %v57
  %108 = vmatpush.msra.mxu0 %v56
  %109 = vmatmul.f32.gmra.mxu0 %v50
  %v110 = vpop.f32.mrf.mxu0
  %v111 = vadd.f32 %v80, %v110
  %112 = vmatmul.f32.gmra.mxu0 %v52
  %v113 = vpop.f32.mrf.mxu0
  %v114 = vadd.f32 %v81, %v113
  %115 = vmatmul.f32.gmra.mxu0 %v54
  %v116 = vpop.f32.mrf.mxu0
  %v117 = vadd.f32 %v82, %v116
  %118 = vdwg.mxu0
  %119 = vmatpush.msra.mxu0 0.0
  %120 = vmatpush.msra.mxu0 0.0
  %121 = vmatpush.msra.mxu0 0.0
  %122 = vmatpush.msra.mxu0 0.0
  %123 = vmatpush.msra.mxu0 0.0
  %124 = vmatpush.msra.mxu0 0.0
  %125 = vmatpush.msra.mxu0 0.0
  %126 = vmatpush.msra.mxu0 0.0
  %127 = vmatpush.msra.mxu0 %v79
  %128 = vmatpush.msra.mxu0 %v78
  %129 = vmatpush.msra.mxu0 %v77
  %130 = vmatpush.msra.mxu0 %v76
  %131 = vmatpush.msra.mxu0 %v75
  %132 = vmatpush.msra.mxu0 %v74
  %133 = vmatpush.msra.mxu0 %v73
  %134 = vmatpush.msra.mxu0 %v72
  %135 = vmatmul.f32.gmra.mxu0 %v85
  %v136 = vpop.f32.mrf.mxu0
  %v137 = vadd.f32 %v111, %v136
  %138 = vmatmul.f32.gmra.mxu0 %v88
  %v139 = vpop.f32.mrf.mxu0
  %v140 = vadd.f32 %v114, %v139
  %141 = vmatmul.f32.gmra.mxu0 %v91
  %v142 = vpop.f32.mrf.mxu0
  %v143 = vadd.f32 %v117, %v142
  %144 = vdwg.mxu0
  %v145 = vld [vmem:[%s3] sm:$0x1]
  %v146 = vld [vmem:[%s4] sm:$0x1]
  %vm147 = vcmask 261120
  %v148 = vsel %vm147, %v137, 0.0
  %149 = vadd.xlane.f32.xlu0 %v148
  %v150 = vpop.xlane.xlu0 %149
  %v151 = vsel %vm147, %v140, 0.0
  %152 = vadd.xlane.f32.xlu0 %v151
  %v153 = vpop.xlane.xlu0 %152
  %vm154 = vcmask 253952
  %v155 = vsel %vm154, %v143, 0.0
  %156 = vadd.xlane.f32.xlu0 %v155
  %v157 = vpop.xlane.xlu0 %156
  %v158 = vrcp.pop 32.0
  %v159 = vmul.f32 32.0, %v158
  %v160 = vsub.f32 1.0, %v159
  %v161 = vmul.f32 %v158, %v160
  %v162 = vadd.f32 %v158, %v161
  %vm163 = vweird.f32 %v158
  %v164 = vsel %vm163, %v158, %v162
  %v165 = vmul.f32 %v150, %v164
  %v166 = vmul.f32 %v153, %v164
  %v167 = vmul.f32 %v157, %v164
  %v168 = vsub.f32 %v137, %v165
  %v169 = vsub.f32 %v140, %v166
  %v170 = vsub.f32 %v143, %v167
  %v171 = vmul.f32 %v168, %v168
  %v172 = vmul.f32 %v169, %v169
  %v173 = vmul.f32 %v170, %v170
  %v174 = vsel %vm147, %v171, 0.0
  %175 = vadd.xlane.f32.xlu0 %v174
  %v176 = vpop.xlane.xlu0 %175
  %v177 = vsel %vm147, %v172, 0.0
  %178 = vadd.xlane.f32.xlu0 %v177
  %v179 = vpop.xlane.xlu0 %178
  %v180 = vsel %vm154, %v173, 0.0
  %181 = vadd.xlane.f32.xlu0 %v180
  %v182 = vpop.xlane.xlu0 %181
  %v183 = vmul.f32 %v176, %v164
  %v184 = vmul.f32 %v179, %v164
  %v185 = vmul.f32 %v182, %v164
  %v186 = vadd.f32 %v183, 1e-06
  %v187 = vadd.f32 %v184, 1e-06
  %v188 = vadd.f32 %v185, 1e-06
  %v189 = vrsqrt.pop %v186
  %v190 = vmul.f32 %v189, %v186
  %v191 = vmul.f32 %v190, %v189
  %v192 = vmul.f32 0.5, %v191
  %v193 = vsub.f32 1.5, %v192
  %v194 = vmul.f32 %v189, %v193
  %vm195 = vweird.f32 %v186
  %vm196 = vweird.f32 %v189
  %vm197 = vmor %vm195, %vm196
  %v198 = vsel %vm197, %v189, %v194
  %v199 = vrsqrt.pop %v187
  %v200 = vmul.f32 %v199, %v187
  %v201 = vmul.f32 %v200, %v199
  %v202 = vmul.f32 0.5, %v201
  %v203 = vsub.f32 1.5, %v202
  %v204 = vmul.f32 %v199, %v203
  %vm205 = vweird.f32 %v187
  %vm206 = vweird.f32 %v199
  %vm207 = vmor %vm205, %vm206
  %v208 = vsel %vm207, %v199, %v204
  %v209 = vrsqrt.pop %v188
  %v210 = vmul.f32 %v209, %v188
  %v211 = vmul.f32 %v210, %v209
  %v212 = vmul.f32 0.5, %v211
  %v213 = vsub.f32 1.5, %v212
  %v214 = vmul.f32 %v209, %v213
  %vm215 = vweird.f32 %v188
  %vm216 = vweird.f32 %v209
  %vm217 = vmor %vm215, %vm216
  %v218 = vsel %vm217, %v209, %v214
  %v219 = vmul.f32 %v168, %v198
  %v220 = vmul.f32 %v169, %v208
  %v221 = vmul.f32 %v170, %v218
  %v223 = vperm.slane %v145, 0
  %v225 = vmul.f32 %v219, %v223
  %v226 = vmul.f32 %v220, %v223
  %v227 = vmul.f32 %v221, %v223
  %v229 = vperm.slane %v146, 0
  %v231 = vadd.f32 %v225, %v229
  %v232 = vadd.f32 %v226, %v229
  %v233 = vadd.f32 %v227, %v229
  %v234 = vld [vmem:[%s5] sm:$0xff]
  %v235 = vld [vmem:[%s5 + $0x8] sm:$0xff]
  %v236 = vld [vmem:[%s5 + $0x10] sm:$0xff]
  %v237 = vld [vmem:[%s5 + $0x18] sm:$0xff]
  %v238 = vld [vmem:[%s6] sm:$0x1]
  %v240 = vperm.slane %v238, 0
  %v243 = vsel %vm147, %v231, 0
  %v246 = vsel %vm147, %v232, 0
  %v249 = vsel %vm147, %v233, 0
  %251 = vmatpush.msra.mxu0 0.0
  %252 = vmatpush.msra.mxu0 0.0
  %253 = vmatpush.msra.mxu0 0.0
  %254 = vmatpush.msra.mxu0 0.0
  %255 = vmatpush.msra.mxu0 0.0
  %256 = vmatpush.msra.mxu0 0.0
  %257 = vmatpush.msra.mxu0 0.0
  %258 = vmatpush.msra.mxu0 0.0
  %259 = vmatpush.msra.mxu0 0.0
  %260 = vmatpush.msra.mxu0 0.0
  %261 = vmatpush.msra.mxu0 0.0
  %262 = vmatpush.msra.mxu0 0.0
  %263 = vmatpush.msra.mxu0 %v237
  %264 = vmatpush.msra.mxu0 %v236
  %265 = vmatpush.msra.mxu0 %v235
  %266 = vmatpush.msra.mxu0 %v234
  %267 = vmatmul.f32.gmra.mxu0 %v243
  %v268 = vpop.f32.mrf.mxu0
  %v269 = vadd.f32 %v240, %v268
  %270 = vmatmul.f32.gmra.mxu0 %v246
  %v271 = vpop.f32.mrf.mxu0
  %v272 = vadd.f32 %v240, %v271
  %273 = vmatmul.f32.gmra.mxu0 %v249
  %v274 = vpop.f32.mrf.mxu0
  %v275 = vadd.f32 %v240, %v274
  %276 = vdwg.mxu0
  %280 = vrot.lane.b32.xlu0 %v269, 96
  %v281 = vpop.permute.xlu0 %280
  %282 = vrot.lane.b32.xlu0 %v272, 96
  %v283 = vpop.permute.xlu0 %282
  %284 = vrot.lane.b32.xlu0 %v275, 96
  %v285 = vpop.permute.xlu0 %284
  %vm286 = vcmask 64512
  %v287 = vsel %vm286, %v269, 0
  %v289 = vsel %vm286, %v272, 0
  %v291 = vsel %vm286, %v275, 0
  %v293 = vsel %vm286, %v281, 0
  %v295 = vsel %vm286, %v283, 0
  %v297 = vsel %vm286, %v285, 0
  %299 = vmatpush.xpose.msra.mxu0 0.0
  %300 = vmatpush.xpose.msra.mxu0 0.0
  %301 = vmatpush.xpose.msra.mxu0 0.0
  %302 = vmatpush.xpose.msra.mxu0 0.0
  %303 = vmatpush.xpose.msra.mxu0 0.0
  %304 = vmatpush.xpose.msra.mxu0 0.0
  %305 = vmatpush.xpose.msra.mxu0 0.0
  %306 = vmatpush.xpose.msra.mxu0 0.0
  %307 = vmatpush.xpose.msra.mxu0 0.0
  %308 = vmatpush.xpose.msra.mxu0 0.0
  %309 = vmatpush.xpose.msra.mxu0 0.0
  %310 = vmatpush.xpose.msra.mxu0 0.0
  %311 = vmatpush.xpose.msra.mxu0 0.0
  %312 = vmatpush.xpose.msra.mxu0 %v297
  %313 = vmatpush.xpose.msra.mxu0 %v295
  %314 = vmatpush.xpose.msra.mxu0 %v293
  %315 = vmatmul.f32.gmra.mxu0 %v287
  %v316 = vpop.f32.mrf.mxu0
  %v317 = vadd.f32 0.0, %v316
  %318 = vmatmul.f32.gmra.mxu0 %v289
  %v319 = vpop.f32.mrf.mxu0
  %v320 = vadd.f32 0.0, %v319
  %321 = vmatmul.f32.gmra.mxu0 %v291
  %v322 = vpop.f32.mrf.mxu0
  %v323 = vadd.f32 0.0, %v322
  %324 = vdwg.mxu0
  %vm325 = vcmask 138240
  %v326 = vsel %vm325, %v317, -inf
  %327 = vmax.xlane.f32.xlu0 %v326
  %v328 = vpop.xlane.xlu0 %327
  %v329 = vsel %vm325, %v320, -inf
  %330 = vmax.xlane.f32.xlu0 %v329
  %v331 = vpop.xlane.xlu0 %330
  %vm332 = vcmask 131072
  %v333 = vsel %vm332, %v323, -inf
  %334 = vmax.xlane.f32.xlu0 %v333
  %v335 = vpop.xlane.xlu0 %334
  %v336 = vsub.f32 %v317, %v328
  %v337 = vsub.f32 %v320, %v331
  %v338 = vsub.f32 %v323, %v335
  %v339 = vmul.f32 %v336, 1.442695
  %v340 = vpow.pop %v339
  %v341 = vmul.f32 %v337, 1.442695
  %v342 = vpow.pop %v341
  %v343 = vmul.f32 %v338, 1.442695
  %v344 = vpow.pop %v343
  %v345 = vsel %vm325, %v340, 0.0
  %346 = vadd.xlane.f32.xlu0 %v345
  %v347 = vpop.xlane.xlu0 %346
  %v348 = vsel %vm325, %v342, 0.0
  %349 = vadd.xlane.f32.xlu0 %v348
  %v350 = vpop.xlane.xlu0 %349
  %v351 = vsel %vm332, %v344, 0.0
  %352 = vadd.xlane.f32.xlu0 %v351
  %v353 = vpop.xlane.xlu0 %352
  %v354 = vrcp.pop %v347
  %v355 = vrcp.pop %v350
  %v356 = vrcp.pop %v353
  %v357 = vmul.f32 %v340, %v354
  %v358 = vmul.f32 %v342, %v355
  %v359 = vmul.f32 %v344, %v356
  %360 = vrot.lane.b32.xlu0 %v269, 64
  %v361 = vpop.permute.xlu0 %360
  %362 = vrot.lane.b32.xlu0 %v272, 64
  %v363 = vpop.permute.xlu0 %362
  %364 = vrot.lane.b32.xlu0 %v275, 64
  %v365 = vpop.permute.xlu0 %364
  %v369 = vsel %vm325, %v357, 0
  %v372 = vsel %vm325, %v358, 0
  %v375 = vsel %vm325, %v359, 0
  %vm377 = vcmask 1040384
  %v378 = vsel %vm377, %v365, 0
  %380 = vmatpush.msra.mxu0 0.0
  %381 = vmatpush.msra.mxu0 0.0
  %382 = vmatpush.msra.mxu0 0.0
  %383 = vmatpush.msra.mxu0 0.0
  %384 = vmatpush.msra.mxu0 0.0
  %385 = vmatpush.msra.mxu0 0.0
  %386 = vmatpush.msra.mxu0 0.0
  %387 = vmatpush.msra.mxu0 0.0
  %388 = vmatpush.msra.mxu0 0.0
  %389 = vmatpush.msra.mxu0 0.0
  %390 = vmatpush.msra.mxu0 0.0
  %391 = vmatpush.msra.mxu0 0.0
  %392 = vmatpush.msra.mxu0 0.0
  %393 = vmatpush.msra.mxu0 %v378
  %394 = vmatpush.msra.mxu0 %v363
  %395 = vmatpush.msra.mxu0 %v361
  %396 = vmatmul.f32.gmra.mxu0 %v369
  %v397 = vpop.f32.mrf.mxu0
  %v398 = vadd.f32 0.0, %v397
  %399 = vmatmul.f32.gmra.mxu0 %v372
  %v400 = vpop.f32.mrf.mxu0
  %v401 = vadd.f32 0.0, %v400
  %402 = vmatmul.f32.gmra.mxu0 %v375
  %v403 = vpop.f32.mrf.mxu0
  %v404 = vadd.f32 0.0, %v403
  %405 = vdwg.mxu0
  %406 = vrot.lane.b32.xlu0 %v269, 120
  %v407 = vpop.permute.xlu0 %406
  %408 = vrot.lane.b32.xlu0 %v272, 120
  %v409 = vpop.permute.xlu0 %408
  %410 = vrot.lane.b32.xlu0 %v275, 120
  %v411 = vpop.permute.xlu0 %410
  %412 = vrot.lane.b32.xlu0 %v269, 88
  %v413 = vpop.permute.xlu0 %412
  %414 = vrot.lane.b32.xlu0 %v272, 88
  %v415 = vpop.permute.xlu0 %414
  %416 = vrot.lane.b32.xlu0 %v275, 88
  %v417 = vpop.permute.xlu0 %416
  %v418 = vsel %vm286, %v407, 0
  %v420 = vsel %vm286, %v409, 0
  %v422 = vsel %vm286, %v411, 0
  %v424 = vsel %vm286, %v413, 0
  %v426 = vsel %vm286, %v415, 0
  %v428 = vsel %vm286, %v417, 0
  %430 = vmatpush.xpose.msra.mxu0 0.0
  %431 = vmatpush.xpose.msra.mxu0 0.0
  %432 = vmatpush.xpose.msra.mxu0 0.0
  %433 = vmatpush.xpose.msra.mxu0 0.0
  %434 = vmatpush.xpose.msra.mxu0 0.0
  %435 = vmatpush.xpose.msra.mxu0 0.0
  %436 = vmatpush.xpose.msra.mxu0 0.0
  %437 = vmatpush.xpose.msra.mxu0 0.0
  %438 = vmatpush.xpose.msra.mxu0 0.0
  %439 = vmatpush.xpose.msra.mxu0 0.0
  %440 = vmatpush.xpose.msra.mxu0 0.0
  %441 = vmatpush.xpose.msra.mxu0 0.0
  %442 = vmatpush.xpose.msra.mxu0 0.0
  %443 = vmatpush.xpose.msra.mxu0 %v428
  %444 = vmatpush.xpose.msra.mxu0 %v426
  %445 = vmatpush.xpose.msra.mxu0 %v424
  %446 = vmatmul.f32.gmra.mxu0 %v418
  %v447 = vpop.f32.mrf.mxu0
  %v448 = vadd.f32 0.0, %v447
  %449 = vmatmul.f32.gmra.mxu0 %v420
  %v450 = vpop.f32.mrf.mxu0
  %v451 = vadd.f32 0.0, %v450
  %452 = vmatmul.f32.gmra.mxu0 %v422
  %v453 = vpop.f32.mrf.mxu0
  %v454 = vadd.f32 0.0, %v453
  %455 = vdwg.mxu0
  %v456 = vsel %vm325, %v448, -inf
  %457 = vmax.xlane.f32.xlu0 %v456
  %v458 = vpop.xlane.xlu0 %457
  %v459 = vsel %vm325, %v451, -inf
  %460 = vmax.xlane.f32.xlu0 %v459
  %v461 = vpop.xlane.xlu0 %460
  %v462 = vsel %vm332, %v454, -inf
  %463 = vmax.xlane.f32.xlu0 %v462
  %v464 = vpop.xlane.xlu0 %463
  %v465 = vsub.f32 %v448, %v458
  %v466 = vsub.f32 %v451, %v461
  %v467 = vsub.f32 %v454, %v464
  %v468 = vmul.f32 %v465, 1.442695
  %v469 = vpow.pop %v468
  %v470 = vmul.f32 %v466, 1.442695
  %v471 = vpow.pop %v470
  %v472 = vmul.f32 %v467, 1.442695
  %v473 = vpow.pop %v472
  %v474 = vsel %vm325, %v469, 0.0
  %475 = vadd.xlane.f32.xlu0 %v474
  %v476 = vpop.xlane.xlu0 %475
  %v477 = vsel %vm325, %v471, 0.0
  %478 = vadd.xlane.f32.xlu0 %v477
  %v479 = vpop.xlane.xlu0 %478
  %v480 = vsel %vm332, %v473, 0.0
  %481 = vadd.xlane.f32.xlu0 %v480
  %v482 = vpop.xlane.xlu0 %481
  %v483 = vrcp.pop %v476
  %v484 = vrcp.pop %v479
  %v485 = vrcp.pop %v482
  %v486 = vmul.f32 %v469, %v483
  %v487 = vmul.f32 %v471, %v484
  %v488 = vmul.f32 %v473, %v485
  %489 = vrot.lane.b32.xlu0 %v269, 56
  %v490 = vpop.permute.xlu0 %489
  %491 = vrot.lane.b32.xlu0 %v272, 56
  %v492 = vpop.permute.xlu0 %491
  %493 = vrot.lane.b32.xlu0 %v275, 56
  %v494 = vpop.permute.xlu0 %493
  %v498 = vsel %vm325, %v486, 0
  %v501 = vsel %vm325, %v487, 0
  %v504 = vsel %vm325, %v488, 0
  %v506 = vsel %vm377, %v494, 0
  %508 = vmatpush.msra.mxu0 0.0
  %509 = vmatpush.msra.mxu0 0.0
  %510 = vmatpush.msra.mxu0 0.0
  %511 = vmatpush.msra.mxu0 0.0
  %512 = vmatpush.msra.mxu0 0.0
  %513 = vmatpush.msra.mxu0 0.0
  %514 = vmatpush.msra.mxu0 0.0
  %515 = vmatpush.msra.mxu0 0.0
  %516 = vmatpush.msra.mxu0 0.0
  %517 = vmatpush.msra.mxu0 0.0
  %518 = vmatpush.msra.mxu0 0.0
  %519 = vmatpush.msra.mxu0 0.0
  %520 = vmatpush.msra.mxu0 0.0
  %521 = vmatpush.msra.mxu0 %v506
  %522 = vmatpush.msra.mxu0 %v492
  %523 = vmatpush.msra.mxu0 %v490
  %524 = vmatmul.f32.gmra.mxu0 %v498
  %v525 = vpop.f32.mrf.mxu0
  %v526 = vadd.f32 0.0, %v525
  %527 = vmatmul.f32.gmra.mxu0 %v501
  %v528 = vpop.f32.mrf.mxu0
  %v529 = vadd.f32 0.0, %v528
  %530 = vmatmul.f32.gmra.mxu0 %v504
  %v531 = vpop.f32.mrf.mxu0
  %v532 = vadd.f32 0.0, %v531
  %533 = vdwg.mxu0
  %534 = vrot.lane.b32.xlu0 %v269, 112
  %v535 = vpop.permute.xlu0 %534
  %536 = vrot.lane.b32.xlu0 %v272, 112
  %v537 = vpop.permute.xlu0 %536
  %538 = vrot.lane.b32.xlu0 %v275, 112
  %v539 = vpop.permute.xlu0 %538
  %540 = vrot.lane.b32.xlu0 %v269, 80
  %v541 = vpop.permute.xlu0 %540
  %542 = vrot.lane.b32.xlu0 %v272, 80
  %v543 = vpop.permute.xlu0 %542
  %544 = vrot.lane.b32.xlu0 %v275, 80
  %v545 = vpop.permute.xlu0 %544
  %v546 = vsel %vm286, %v535, 0
  %v548 = vsel %vm286, %v537, 0
  %v550 = vsel %vm286, %v539, 0
  %v552 = vsel %vm286, %v541, 0
  %v554 = vsel %vm286, %v543, 0
  %v556 = vsel %vm286, %v545, 0
  %558 = vmatpush.xpose.msra.mxu0 0.0
  %559 = vmatpush.xpose.msra.mxu0 0.0
  %560 = vmatpush.xpose.msra.mxu0 0.0
  %561 = vmatpush.xpose.msra.mxu0 0.0
  %562 = vmatpush.xpose.msra.mxu0 0.0
  %563 = vmatpush.xpose.msra.mxu0 0.0
  %564 = vmatpush.xpose.msra.mxu0 0.0
  %565 = vmatpush.xpose.msra.mxu0 0.0
  %566 = vmatpush.xpose.msra.mxu0 0.0
  %567 = vmatpush.xpose.msra.mxu0 0.0
  %568 = vmatpush.xpose.msra.mxu0 0.0
  %569 = vmatpush.xpose.msra.mxu0 0.0
  %570 = vmatpush.xpose.msra.mxu0 0.0
  %571 = vmatpush.xpose.msra.mxu0 %v556
  %572 = vmatpush.xpose.msra.mxu0 %v554
  %573 = vmatpush.xpose.msra.mxu0 %v552
  %574 = vmatmul.f32.gmra.mxu0 %v546
  %v575 = vpop.f32.mrf.mxu0
  %v576 = vadd.f32 0.0, %v575
  %577 = vmatmul.f32.gmra.mxu0 %v548
  %v578 = vpop.f32.mrf.mxu0
  %v579 = vadd.f32 0.0, %v578
  %580 = vmatmul.f32.gmra.mxu0 %v550
  %v581 = vpop.f32.mrf.mxu0
  %v582 = vadd.f32 0.0, %v581
  %583 = vdwg.mxu0
  %v584 = vsel %vm325, %v576, -inf
  %585 = vmax.xlane.f32.xlu0 %v584
  %v586 = vpop.xlane.xlu0 %585
  %v587 = vsel %vm325, %v579, -inf
  %588 = vmax.xlane.f32.xlu0 %v587
  %v589 = vpop.xlane.xlu0 %588
  %v590 = vsel %vm332, %v582, -inf
  %591 = vmax.xlane.f32.xlu0 %v590
  %v592 = vpop.xlane.xlu0 %591
  %v593 = vsub.f32 %v576, %v586
  %v594 = vsub.f32 %v579, %v589
  %v595 = vsub.f32 %v582, %v592
  %v596 = vmul.f32 %v593, 1.442695
  %v597 = vpow.pop %v596
  %v598 = vmul.f32 %v594, 1.442695
  %v599 = vpow.pop %v598
  %v600 = vmul.f32 %v595, 1.442695
  %v601 = vpow.pop %v600
  %v602 = vsel %vm325, %v597, 0.0
  %603 = vadd.xlane.f32.xlu0 %v602
  %v604 = vpop.xlane.xlu0 %603
  %v605 = vsel %vm325, %v599, 0.0
  %606 = vadd.xlane.f32.xlu0 %v605
  %v607 = vpop.xlane.xlu0 %606
  %v608 = vsel %vm332, %v601, 0.0
  %609 = vadd.xlane.f32.xlu0 %v608
  %v610 = vpop.xlane.xlu0 %609
  %v611 = vrcp.pop %v604
  %v612 = vrcp.pop %v607
  %v613 = vrcp.pop %v610
  %v614 = vmul.f32 %v597, %v611
  %v615 = vmul.f32 %v599, %v612
  %v616 = vmul.f32 %v601, %v613
  %617 = vrot.lane.b32.xlu0 %v269, 48
  %v618 = vpop.permute.xlu0 %617
  %619 = vrot.lane.b32.xlu0 %v272, 48
  %v620 = vpop.permute.xlu0 %619
  %621 = vrot.lane.b32.xlu0 %v275, 48
  %v622 = vpop.permute.xlu0 %621
  %v626 = vsel %vm325, %v614, 0
  %v629 = vsel %vm325, %v615, 0
  %v632 = vsel %vm325, %v616, 0
  %v634 = vsel %vm377, %v622, 0
  %636 = vmatpush.msra.mxu0 0.0
  %637 = vmatpush.msra.mxu0 0.0
  %638 = vmatpush.msra.mxu0 0.0
  %639 = vmatpush.msra.mxu0 0.0
  %640 = vmatpush.msra.mxu0 0.0
  %641 = vmatpush.msra.mxu0 0.0
  %642 = vmatpush.msra.mxu0 0.0
  %643 = vmatpush.msra.mxu0 0.0
  %644 = vmatpush.msra.mxu0 0.0
  %645 = vmatpush.msra.mxu0 0.0
  %646 = vmatpush.msra.mxu0 0.0
  %647 = vmatpush.msra.mxu0 0.0
  %648 = vmatpush.msra.mxu0 0.0
  %649 = vmatpush.msra.mxu0 %v634
  %650 = vmatpush.msra.mxu0 %v620
  %651 = vmatpush.msra.mxu0 %v618
  %652 = vmatmul.f32.gmra.mxu0 %v626
  %v653 = vpop.f32.mrf.mxu0
  %v654 = vadd.f32 0.0, %v653
  %655 = vmatmul.f32.gmra.mxu0 %v629
  %v656 = vpop.f32.mrf.mxu0
  %v657 = vadd.f32 0.0, %v656
  %658 = vmatmul.f32.gmra.mxu0 %v632
  %v659 = vpop.f32.mrf.mxu0
  %v660 = vadd.f32 0.0, %v659
  %661 = vdwg.mxu0
  %662 = vrot.lane.b32.xlu0 %v269, 104
  %v663 = vpop.permute.xlu0 %662
  %664 = vrot.lane.b32.xlu0 %v272, 104
  %v665 = vpop.permute.xlu0 %664
  %666 = vrot.lane.b32.xlu0 %v275, 104
  %v667 = vpop.permute.xlu0 %666
  %668 = vrot.lane.b32.xlu0 %v269, 72
  %v669 = vpop.permute.xlu0 %668
  %670 = vrot.lane.b32.xlu0 %v272, 72
  %v671 = vpop.permute.xlu0 %670
  %672 = vrot.lane.b32.xlu0 %v275, 72
  %v673 = vpop.permute.xlu0 %672
  %v674 = vsel %vm286, %v663, 0
  %v676 = vsel %vm286, %v665, 0
  %v678 = vsel %vm286, %v667, 0
  %v680 = vsel %vm286, %v669, 0
  %v682 = vsel %vm286, %v671, 0
  %v684 = vsel %vm286, %v673, 0
  %686 = vmatpush.xpose.msra.mxu0 0.0
  %687 = vmatpush.xpose.msra.mxu0 0.0
  %688 = vmatpush.xpose.msra.mxu0 0.0
  %689 = vmatpush.xpose.msra.mxu0 0.0
  %690 = vmatpush.xpose.msra.mxu0 0.0
  %691 = vmatpush.xpose.msra.mxu0 0.0
  %692 = vmatpush.xpose.msra.mxu0 0.0
  %693 = vmatpush.xpose.msra.mxu0 0.0
  %694 = vmatpush.xpose.msra.mxu0 0.0
  %695 = vmatpush.xpose.msra.mxu0 0.0
  %696 = vmatpush.xpose.msra.mxu0 0.0
  %697 = vmatpush.xpose.msra.mxu0 0.0
  %698 = vmatpush.xpose.msra.mxu0 0.0
  %699 = vmatpush.xpose.msra.mxu0 %v684
  %700 = vmatpush.xpose.msra.mxu0 %v682
  %701 = vmatpush.xpose.msra.mxu0 %v680
  %702 = vmatmul.f32.gmra.mxu0 %v674
  %v703 = vpop.f32.mrf.mxu0
  %v704 = vadd.f32 0.0, %v703
  %705 = vmatmul.f32.gmra.mxu0 %v676
  %v706 = vpop.f32.mrf.mxu0
  %v707 = vadd.f32 0.0, %v706
  %708 = vmatmul.f32.gmra.mxu0 %v678
  %v709 = vpop.f32.mrf.mxu0
  %v710 = vadd.f32 0.0, %v709
  %711 = vdwg.mxu0
  %v712 = vsel %vm325, %v704, -inf
  %713 = vmax.xlane.f32.xlu0 %v712
  %v714 = vpop.xlane.xlu0 %713
  %v715 = vsel %vm325, %v707, -inf
  %716 = vmax.xlane.f32.xlu0 %v715
  %v717 = vpop.xlane.xlu0 %716
  %v718 = vsel %vm332, %v710, -inf
  %719 = vmax.xlane.f32.xlu0 %v718
  %v720 = vpop.xlane.xlu0 %719
  %v721 = vsub.f32 %v704, %v714
  %v722 = vsub.f32 %v707, %v717
  %v723 = vsub.f32 %v710, %v720
  %v724 = vmul.f32 %v721, 1.442695
  %v725 = vpow.pop %v724
  %v726 = vmul.f32 %v722, 1.442695
  %v727 = vpow.pop %v726
  %v728 = vmul.f32 %v723, 1.442695
  %v729 = vpow.pop %v728
  %v730 = vsel %vm325, %v725, 0.0
  %731 = vadd.xlane.f32.xlu0 %v730
  %v732 = vpop.xlane.xlu0 %731
  %v733 = vsel %vm325, %v727, 0.0
  %734 = vadd.xlane.f32.xlu0 %v733
  %v735 = vpop.xlane.xlu0 %734
  %v736 = vsel %vm332, %v729, 0.0
  %737 = vadd.xlane.f32.xlu0 %v736
  %v738 = vpop.xlane.xlu0 %737
  %v739 = vrcp.pop %v732
  %v740 = vrcp.pop %v735
  %v741 = vrcp.pop %v738
  %v742 = vmul.f32 %v725, %v739
  %v743 = vmul.f32 %v727, %v740
  %v744 = vmul.f32 %v729, %v741
  %745 = vrot.lane.b32.xlu0 %v269, 40
  %v746 = vpop.permute.xlu0 %745
  %747 = vrot.lane.b32.xlu0 %v272, 40
  %v748 = vpop.permute.xlu0 %747
  %749 = vrot.lane.b32.xlu0 %v275, 40
  %v750 = vpop.permute.xlu0 %749
  %v754 = vsel %vm325, %v742, 0
  %v757 = vsel %vm325, %v743, 0
  %v760 = vsel %vm325, %v744, 0
  %v762 = vsel %vm377, %v750, 0
  %764 = vmatpush.msra.mxu0 0.0
  %765 = vmatpush.msra.mxu0 0.0
  %766 = vmatpush.msra.mxu0 0.0
  %767 = vmatpush.msra.mxu0 0.0
  %768 = vmatpush.msra.mxu0 0.0
  %769 = vmatpush.msra.mxu0 0.0
  %770 = vmatpush.msra.mxu0 0.0
  %771 = vmatpush.msra.mxu0 0.0
  %772 = vmatpush.msra.mxu0 0.0
  %773 = vmatpush.msra.mxu0 0.0
  %774 = vmatpush.msra.mxu0 0.0
  %775 = vmatpush.msra.mxu0 0.0
  %776 = vmatpush.msra.mxu0 0.0
  %777 = vmatpush.msra.mxu0 %v762
  %778 = vmatpush.msra.mxu0 %v748
  %779 = vmatpush.msra.mxu0 %v746
  %780 = vmatmul.f32.gmra.mxu0 %v754
  %v781 = vpop.f32.mrf.mxu0
  %v782 = vadd.f32 0.0, %v781
  %783 = vmatmul.f32.gmra.mxu0 %v757
  %v784 = vpop.f32.mrf.mxu0
  %v785 = vadd.f32 0.0, %v784
  %786 = vmatmul.f32.gmra.mxu0 %v760
  %v787 = vpop.f32.mrf.mxu0
  %v788 = vadd.f32 0.0, %v787
  %789 = vdwg.mxu0
  %793 = vrot.lane.b32.xlu0 %v526, 8
  %v794 = vpop.permute.xlu0 %793
  %795 = vrot.lane.b32.xlu0 %v529, 8
  %v796 = vpop.permute.xlu0 %795
  %797 = vrot.lane.b32.xlu0 %v532, 8
  %v798 = vpop.permute.xlu0 %797
  %805 = vrot.lane.b32.xlu0 %v654, 16
  %v806 = vpop.permute.xlu0 %805
  %807 = vrot.lane.b32.xlu0 %v657, 16
  %v808 = vpop.permute.xlu0 %807
  %809 = vrot.lane.b32.xlu0 %v660, 16
  %v810 = vpop.permute.xlu0 %809
  %817 = vrot.lane.b32.xlu0 %v782, 24
  %v818 = vpop.permute.xlu0 %817
  %819 = vrot.lane.b32.xlu0 %v785, 24
  %v820 = vpop.permute.xlu0 %819
  %821 = vrot.lane.b32.xlu0 %v788, 24
  %v822 = vpop.permute.xlu0 %821
  %v826 = vsel %vm286, %v398, %v794
  %v827 = vsel %vm286, %v401, %v796
  %v828 = vsel %vm286, %v404, %v798
  %vm829 = vcmask 130048
  %v830 = vsel %vm829, %v826, %v806
  %v831 = vsel %vm829, %v827, %v808
  %v832 = vsel %vm829, %v828, %v810
  %vm833 = vcmask 195584
  %v834 = vsel %vm833, %v830, %v818
  %v835 = vsel %vm833, %v831, %v820
  %v836 = vsel %vm833, %v832, %v822
  %v837 = vld [vmem:[%s7] sm:$0xff]
  %v838 = vld [vmem:[%s7 + $0x8] sm:$0xff]
  %v839 = vld [vmem:[%s7 + $0x10] sm:$0xff]
  %v840 = vld [vmem:[%s7 + $0x18] sm:$0xff]
  %v842 = vsel %vm147, %v834, 0
  %v845 = vsel %vm147, %v835, 0
  %v848 = vsel %vm147, %v836, 0
  %850 = vmatpush.msra.mxu0 0.0
  %851 = vmatpush.msra.mxu0 0.0
  %852 = vmatpush.msra.mxu0 0.0
  %853 = vmatpush.msra.mxu0 0.0
  %854 = vmatpush.msra.mxu0 0.0
  %855 = vmatpush.msra.mxu0 0.0
  %856 = vmatpush.msra.mxu0 0.0
  %857 = vmatpush.msra.mxu0 0.0
  %858 = vmatpush.msra.mxu0 0.0
  %859 = vmatpush.msra.mxu0 0.0
  %860 = vmatpush.msra.mxu0 0.0
  %861 = vmatpush.msra.mxu0 0.0
  %862 = vmatpush.msra.mxu0 %v840
  %863 = vmatpush.msra.mxu0 %v839
  %864 = vmatpush.msra.mxu0 %v838
  %865 = vmatpush.msra.mxu0 %v837
  %866 = vmatmul.f32.gmra.mxu0 %v842
  %v867 = vpop.f32.mrf.mxu0
  %v868 = vadd.f32 0.0, %v867
  %869 = vmatmul.f32.gmra.mxu0 %v845
  %v870 = vpop.f32.mrf.mxu0
  %v871 = vadd.f32 0.0, %v870
  %872 = vmatmul.f32.gmra.mxu0 %v848
  %v873 = vpop.f32.mrf.mxu0
  %v874 = vadd.f32 0.0, %v873
  %875 = vdwg.mxu0
  %v876 = vadd.f32 %v137, %v868
  %v877 = vadd.f32 %v140, %v871
  %v878 = vadd.f32 %v143, %v874
  %v879 = vld [vmem:[%s8] sm:$0x1]
  %v881 = vperm.slane %v879, 0
  %v883 = vadd.f32 %v876, %v881
  %v884 = vadd.f32 %v877, %v881
  %v885 = vadd.f32 %v878, %v881
  %v886 = vld [vmem:[%s9] sm:$0x1]
  %v887 = vld [vmem:[%s10] sm:$0x1]
  %v888 = vsel %vm147, %v883, 0.0
  %889 = vadd.xlane.f32.xlu0 %v888
  %v890 = vpop.xlane.xlu0 %889
  %v891 = vsel %vm147, %v884, 0.0
  %892 = vadd.xlane.f32.xlu0 %v891
  %v893 = vpop.xlane.xlu0 %892
  %v894 = vsel %vm154, %v885, 0.0
  %895 = vadd.xlane.f32.xlu0 %v894
  %v896 = vpop.xlane.xlu0 %895
  %v897 = vmul.f32 %v890, %v164
  %v898 = vmul.f32 %v893, %v164
  %v899 = vmul.f32 %v896, %v164
  %v900 = vsub.f32 %v883, %v897
  %v901 = vsub.f32 %v884, %v898
  %v902 = vsub.f32 %v885, %v899
  %v903 = vmul.f32 %v900, %v900
  %v904 = vmul.f32 %v901, %v901
  %v905 = vmul.f32 %v902, %v902
  %v906 = vsel %vm147, %v903, 0.0
  %907 = vadd.xlane.f32.xlu0 %v906
  %v908 = vpop.xlane.xlu0 %907
  %v909 = vsel %vm147, %v904, 0.0
  %910 = vadd.xlane.f32.xlu0 %v909
  %v911 = vpop.xlane.xlu0 %910
  %v912 = vsel %vm154, %v905, 0.0
  %913 = vadd.xlane.f32.xlu0 %v912
  %v914 = vpop.xlane.xlu0 %913
  %v915 = vmul.f32 %v908, %v164
  %v916 = vmul.f32 %v911, %v164
  %v917 = vmul.f32 %v914, %v164
  %v918 = vadd.f32 %v915, 1e-06
  %v919 = vadd.f32 %v916, 1e-06
  %v920 = vadd.f32 %v917, 1e-06
  %v921 = vrsqrt.pop %v918
  %v922 = vmul.f32 %v921, %v918
  %v923 = vmul.f32 %v922, %v921
  %v924 = vmul.f32 0.5, %v923
  %v925 = vsub.f32 1.5, %v924
  %v926 = vmul.f32 %v921, %v925
  %vm927 = vweird.f32 %v918
  %vm928 = vweird.f32 %v921
  %vm929 = vmor %vm927, %vm928
  %v930 = vsel %vm929, %v921, %v926
  %v931 = vrsqrt.pop %v919
  %v932 = vmul.f32 %v931, %v919
  %v933 = vmul.f32 %v932, %v931
  %v934 = vmul.f32 0.5, %v933
  %v935 = vsub.f32 1.5, %v934
  %v936 = vmul.f32 %v931, %v935
  %vm937 = vweird.f32 %v919
  %vm938 = vweird.f32 %v931
  %vm939 = vmor %vm937, %vm938
  %v940 = vsel %vm939, %v931, %v936
  %v941 = vrsqrt.pop %v920
  %v942 = vmul.f32 %v941, %v920
  %v943 = vmul.f32 %v942, %v941
  %v944 = vmul.f32 0.5, %v943
  %v945 = vsub.f32 1.5, %v944
  %v946 = vmul.f32 %v941, %v945
  %vm947 = vweird.f32 %v920
  %vm948 = vweird.f32 %v941
  %vm949 = vmor %vm947, %vm948
  %v950 = vsel %vm949, %v941, %v946
  %v951 = vmul.f32 %v900, %v930
  %v952 = vmul.f32 %v901, %v940
  %v953 = vmul.f32 %v902, %v950
  %v955 = vperm.slane %v886, 0
  %v957 = vmul.f32 %v951, %v955
  %v958 = vmul.f32 %v952, %v955
  %v959 = vmul.f32 %v953, %v955
  %v961 = vperm.slane %v887, 0
  %v963 = vadd.f32 %v957, %v961
  %v964 = vadd.f32 %v958, %v961
  %v965 = vadd.f32 %v959, %v961
  %v966 = vld [vmem:[%s11] sm:$0xff]
  %v967 = vld [vmem:[%s11 + $0x8] sm:$0xff]
  %v968 = vld [vmem:[%s11 + $0x10] sm:$0xff]
  %v969 = vld [vmem:[%s11 + $0x18] sm:$0xff]
  %v970 = vld [vmem:[%s12] sm:$0x1]
  %v972 = vperm.slane %v970, 0
  %v975 = vsel %vm147, %v963, 0
  %v978 = vsel %vm147, %v964, 0
  %v981 = vsel %vm147, %v965, 0
  %983 = vmatpush.msra.mxu0 0.0
  %984 = vmatpush.msra.mxu0 0.0
  %985 = vmatpush.msra.mxu0 0.0
  %986 = vmatpush.msra.mxu0 0.0
  %987 = vmatpush.msra.mxu0 0.0
  %988 = vmatpush.msra.mxu0 0.0
  %989 = vmatpush.msra.mxu0 0.0
  %990 = vmatpush.msra.mxu0 0.0
  %991 = vmatpush.msra.mxu0 0.0
  %992 = vmatpush.msra.mxu0 0.0
  %993 = vmatpush.msra.mxu0 0.0
  %994 = vmatpush.msra.mxu0 0.0
  %995 = vmatpush.msra.mxu0 %v969
  %996 = vmatpush.msra.mxu0 %v968
  %997 = vmatpush.msra.mxu0 %v967
  %998 = vmatpush.msra.mxu0 %v966
  %999 = vmatmul.f32.gmra.mxu0 %v975
  %v1000 = vpop.f32.mrf.mxu0
  %v1001 = vadd.f32 %v972, %v1000
  %1002 = vmatmul.f32.gmra.mxu0 %v978
  %v1003 = vpop.f32.mrf.mxu0
  %v1004 = vadd.f32 %v972, %v1003
  %1005 = vmatmul.f32.gmra.mxu0 %v981
  %v1006 = vpop.f32.mrf.mxu0
  %v1007 = vadd.f32 %v972, %v1006
  %1008 = vdwg.mxu0
  %v1009 = vmul.f32 %v1001, 0.5
  %v1010 = vmul.f32 %v1004, 0.5
  %v1011 = vmul.f32 %v1007, 0.5
  %v1012 = vmul.f32 %v1001, 0.044715
  %v1013 = vmul.f32 %v1004, 0.044715
  %v1014 = vmul.f32 %v1007, 0.044715
  %v1015 = vmul.f32 %v1012, %v1001
  %v1016 = vmul.f32 %v1013, %v1004
  %v1017 = vmul.f32 %v1014, %v1007
  %v1018 = vmul.f32 %v1015, %v1001
  %v1019 = vmul.f32 %v1016, %v1004
  %v1020 = vmul.f32 %v1017, %v1007
  %v1021 = vadd.f32 %v1001, %v1018
  %v1022 = vadd.f32 %v1004, %v1019
  %v1023 = vadd.f32 %v1007, %v1020
  %v1024 = vmul.f32 %v1021, 0.7978846
  %v1025 = vmul.f32 %v1022, 0.7978846
  %v1026 = vmul.f32 %v1023, 0.7978846
  %v1027 = vtanh.pop %v1024
  %v1028 = vtanh.pop %v1025
  %v1029 = vtanh.pop %v1026
  %v1030 = vadd.f32 %v1027, 1.0
  %v1031 = vadd.f32 %v1028, 1.0
  %v1032 = vadd.f32 %v1029, 1.0
  %v1033 = vmul.f32 %v1009, %v1030
  %v1034 = vmul.f32 %v1010, %v1031
  %v1035 = vmul.f32 %v1011, %v1032
  %v1036 = vld [vmem:[%s13] sm:$0xff]
  %v1037 = vld [vmem:[%s13 + $0x8] sm:$0xff]
  %v1038 = vld [vmem:[%s13 + $0x10] sm:$0xff]
  %v1039 = vld [vmem:[%s13 + $0x18] sm:$0xff]
  %v1040 = vld [vmem:[%s13 + $0x20] sm:$0xff]
  %v1041 = vld [vmem:[%s13 + $0x28] sm:$0xff]
  %v1042 = vld [vmem:[%s13 + $0x30] sm:$0xff]
  %v1043 = vld [vmem:[%s13 + $0x38] sm:$0xff]
  %v1044 = vld [vmem:[%s13 + $0x40] sm:$0xff]
  %v1045 = vld [vmem:[%s13 + $0x48] sm:$0xff]
  %v1046 = vld [vmem:[%s13 + $0x50] sm:$0xff]
  %v1047 = vld [vmem:[%s13 + $0x58] sm:$0xff]
  %v1048 = vld [vmem:[%s13 + $0x60] sm:$0xff]
  %v1049 = vld [vmem:[%s13 + $0x68] sm:$0xff]
  %v1050 = vld [vmem:[%s13 + $0x70] sm:$0xff]
  %v1051 = vld [vmem:[%s13 + $0x78] sm:$0xff]
  %1052 = vmatpush.msra.mxu0 %v1051
  %1053 = vmatpush.msra.mxu0 %v1050
  %1054 = vmatpush.msra.mxu0 %v1049
  %1055 = vmatpush.msra.mxu0 %v1048
  %1056 = vmatpush.msra.mxu0 %v1047
  %1057 = vmatpush.msra.mxu0 %v1046
  %1058 = vmatpush.msra.mxu0 %v1045
  %1059 = vmatpush.msra.mxu0 %v1044
  %1060 = vmatpush.msra.mxu0 %v1043
  %1061 = vmatpush.msra.mxu0 %v1042
  %1062 = vmatpush.msra.mxu0 %v1041
  %1063 = vmatpush.msra.mxu0 %v1040
  %1064 = vmatpush.msra.mxu0 %v1039
  %1065 = vmatpush.msra.mxu0 %v1038
  %1066 = vmatpush.msra.mxu0 %v1037
  %1067 = vmatpush.msra.mxu0 %v1036
  %1068 = vmatmul.f32.gmra.mxu0 %v1033
  %v1069 = vpop.f32.mrf.mxu0
  %v1070 = vadd.f32 0.0, %v1069
  %1071 = vmatmul.f32.gmra.mxu0 %v1034
  %v1072 = vpop.f32.mrf.mxu0
  %v1073 = vadd.f32 0.0, %v1072
  %1074 = vmatmul.f32.gmra.mxu0 %v1035
  %v1075 = vpop.f32.mrf.mxu0
  %v1076 = vadd.f32 0.0, %v1075
  %1077 = vdwg.mxu0
  %v1078 = vadd.f32 %v883, %v1070
  %v1079 = vadd.f32 %v884, %v1073
  %v1080 = vadd.f32 %v885, %v1076
  %v1081 = vld [vmem:[%s14] sm:$0x1]
  %v1083 = vperm.slane %v1081, 0
  %v1085 = vadd.f32 %v1078, %v1083
  %v1086 = vadd.f32 %v1079, %v1083
  %v1087 = vadd.f32 %v1080, %v1083
  %s1088 = scalar_lea.vmem %s3, 1
  %v1089 = vld [vmem:[%s1088] sm:$0x1]
  %s1090 = scalar_lea.vmem %s4, 1
  %v1091 = vld [vmem:[%s1090] sm:$0x1]
  %v1092 = vsel %vm147, %v1085, 0.0
  %1093 = vadd.xlane.f32.xlu0 %v1092
  %v1094 = vpop.xlane.xlu0 %1093
  %v1095 = vsel %vm147, %v1086, 0.0
  %1096 = vadd.xlane.f32.xlu0 %v1095
  %v1097 = vpop.xlane.xlu0 %1096
  %v1098 = vsel %vm154, %v1087, 0.0
  %1099 = vadd.xlane.f32.xlu0 %v1098
  %v1100 = vpop.xlane.xlu0 %1099
  %v1101 = vmul.f32 %v1094, %v164
  %v1102 = vmul.f32 %v1097, %v164
  %v1103 = vmul.f32 %v1100, %v164
  %v1104 = vsub.f32 %v1085, %v1101
  %v1105 = vsub.f32 %v1086, %v1102
  %v1106 = vsub.f32 %v1087, %v1103
  %v1107 = vmul.f32 %v1104, %v1104
  %v1108 = vmul.f32 %v1105, %v1105
  %v1109 = vmul.f32 %v1106, %v1106
  %v1110 = vsel %vm147, %v1107, 0.0
  %1111 = vadd.xlane.f32.xlu0 %v1110
  %v1112 = vpop.xlane.xlu0 %1111
  %v1113 = vsel %vm147, %v1108, 0.0
  %1114 = vadd.xlane.f32.xlu0 %v1113
  %v1115 = vpop.xlane.xlu0 %1114
  %v1116 = vsel %vm154, %v1109, 0.0
  %1117 = vadd.xlane.f32.xlu0 %v1116
  %v1118 = vpop.xlane.xlu0 %1117
  %v1119 = vmul.f32 %v1112, %v164
  %v1120 = vmul.f32 %v1115, %v164
  %v1121 = vmul.f32 %v1118, %v164
  %v1122 = vadd.f32 %v1119, 1e-06
  %v1123 = vadd.f32 %v1120, 1e-06
  %v1124 = vadd.f32 %v1121, 1e-06
  %v1125 = vrsqrt.pop %v1122
  %v1126 = vmul.f32 %v1125, %v1122
  %v1127 = vmul.f32 %v1126, %v1125
  %v1128 = vmul.f32 0.5, %v1127
  %v1129 = vsub.f32 1.5, %v1128
  %v1130 = vmul.f32 %v1125, %v1129
  %vm1131 = vweird.f32 %v1122
  %vm1132 = vweird.f32 %v1125
  %vm1133 = vmor %vm1131, %vm1132
  %v1134 = vsel %vm1133, %v1125, %v1130
  %v1135 = vrsqrt.pop %v1123
  %v1136 = vmul.f32 %v1135, %v1123
  %v1137 = vmul.f32 %v1136, %v1135
  %v1138 = vmul.f32 0.5, %v1137
  %v1139 = vsub.f32 1.5, %v1138
  %v1140 = vmul.f32 %v1135, %v1139
  %vm1141 = vweird.f32 %v1123
  %vm1142 = vweird.f32 %v1135
  %vm1143 = vmor %vm1141, %vm1142
  %v1144 = vsel %vm1143, %v1135, %v1140
  %v1145 = vrsqrt.pop %v1124
  %v1146 = vmul.f32 %v1145, %v1124
  %v1147 = vmul.f32 %v1146, %v1145
  %v1148 = vmul.f32 0.5, %v1147
  %v1149 = vsub.f32 1.5, %v1148
  %v1150 = vmul.f32 %v1145, %v1149
  %vm1151 = vweird.f32 %v1124
  %vm1152 = vweird.f32 %v1145
  %vm1153 = vmor %vm1151, %vm1152
  %v1154 = vsel %vm1153, %v1145, %v1150
  %v1155 = vmul.f32 %v1104, %v1134
  %v1156 = vmul.f32 %v1105, %v1144
  %v1157 = vmul.f32 %v1106, %v1154
  %v1159 = vperm.slane %v1089, 0
  %v1161 = vmul.f32 %v1155, %v1159
  %v1162 = vmul.f32 %v1156, %v1159
  %v1163 = vmul.f32 %v1157, %v1159
  %v1165 = vperm.slane %v1091, 0
  %v1167 = vadd.f32 %v1161, %v1165
  %v1168 = vadd.f32 %v1162, %v1165
  %v1169 = vadd.f32 %v1163, %v1165
  %s1170 = scalar_lea.vmem %s5, 32
  %v1171 = vld [vmem:[%s1170] sm:$0xff]
  %v1172 = vld [vmem:[%s1170 + $0x8] sm:$0xff]
  %v1173 = vld [vmem:[%s1170 + $0x10] sm:$0xff]
  %v1174 = vld [vmem:[%s1170 + $0x18] sm:$0xff]
  %s1175 = scalar_lea.vmem %s6, 1
  %v1176 = vld [vmem:[%s1175] sm:$0x1]
  %v1178 = vperm.slane %v1176, 0
  %v1181 = vsel %vm147, %v1167, 0
  %v1184 = vsel %vm147, %v1168, 0
  %v1187 = vsel %vm147, %v1169, 0
  %1189 = vmatpush.msra.mxu0 0.0
  %1190 = vmatpush.msra.mxu0 0.0
  %1191 = vmatpush.msra.mxu0 0.0
  %1192 = vmatpush.msra.mxu0 0.0
  %1193 = vmatpush.msra.mxu0 0.0
  %1194 = vmatpush.msra.mxu0 0.0
  %1195 = vmatpush.msra.mxu0 0.0
  %1196 = vmatpush.msra.mxu0 0.0
  %1197 = vmatpush.msra.mxu0 0.0
  %1198 = vmatpush.msra.mxu0 0.0
  %1199 = vmatpush.msra.mxu0 0.0
  %1200 = vmatpush.msra.mxu0 0.0
  %1201 = vmatpush.msra.mxu0 %v1174
  %1202 = vmatpush.msra.mxu0 %v1173
  %1203 = vmatpush.msra.mxu0 %v1172
  %1204 = vmatpush.msra.mxu0 %v1171
  %1205 = vmatmul.f32.gmra.mxu0 %v1181
  %v1206 = vpop.f32.mrf.mxu0
  %v1207 = vadd.f32 %v1178, %v1206
  %1208 = vmatmul.f32.gmra.mxu0 %v1184
  %v1209 = vpop.f32.mrf.mxu0
  %v1210 = vadd.f32 %v1178, %v1209
  %1211 = vmatmul.f32.gmra.mxu0 %v1187
  %v1212 = vpop.f32.mrf.mxu0
  %v1213 = vadd.f32 %v1178, %v1212
  %1214 = vdwg.mxu0
  %1215 = vst [vmem:[%s15] sm:$0xff] %v1207
  %1216 = vst [vmem:[%s15 + $0x8] sm:$0xff] %v1210
  %1217 = vst [vmem:[%s15 + $0x10] sm:$0x1] %v1213
  // Predicated region
  $region62: #{tpu_custom_call.1} parent=0 // pred_check
    _
  $region63: #{tpu_custom_call.1} parent=0 // pred_check_branch
    %1219 = sbr.rel (0) target = $region65
  $region64: #{tpu_custom_call.1} parent=0 // pred_region
    _
  $region65: #{tpu_custom_call.1} parent=0 // pred_fallthru
    _
  // Predicated region
  $region66: #{tpu_custom_call.1} parent=0 // pred_check
    _
  $region67: #{tpu_custom_call.1} parent=0 // pred_check_branch
    %1221 = sbr.rel (0) target = $region69
  $region68: #{tpu_custom_call.1} parent=0 // pred_region
    _
  $region69: #{tpu_custom_call.1} parent=0 // pred_fallthru
    _

</llo_original>
